<compile_context>
chip_gen: v7x
topology: tpu7x:2x2x1
jax: 0.10.0
libtpu: 0.0.40
codegen_flags: <defaults>
</compile_context>

<pallas_src>
import functools

import jax
import jax.numpy as jnp
from jax.experimental import pallas as pl
from jax.experimental.pallas import tpu as pltpu


# ---------------------------------------------------------------------------
# Fused forward:  LSTM (n_layers) + fc1 + fc, single pallas_call
# ---------------------------------------------------------------------------
def lstm_forward(x, hidden, params, hidden_dim, n_layers, output_size):
    """Mirrors LSTM.forward(x, hidden) of the PyTorch module.

    x      : (B, T, input_size)  float32, batch-first
    hidden : (h0, c0), each (n_layers, B, hidden_dim)
    returns: (output (B, output_size), (h_n, c_n))
    """
    assert output_size == 5, "reference forward hard-codes view(B, -1, 5)"
    h0, c0 = hidden
    B, T, I = x.shape
    H = hidden_dim
    G = 4 * H
    L = n_layers

    lstm_p = params["lstm"]

    # ---- host-side (XLA) prep: transpose weights once, pre-sum biases ----
    wih0_t = lstm_p[0][0].T                                   # (I, 4H)
    b0 = (lstm_p[0][2] + lstm_p[0][3]).reshape(1, G)          # (1, 4H)
    whh_t = jnp.stack([lstm_p[l][1].T for l in range(L)])     # (L, H, 4H)
    if L > 1:
        wih_r_t = jnp.stack([lstm_p[l][0].T for l in range(1, L)])          # (L-1, H, 4H)
        b_r = jnp.stack([(lstm_p[l][2] + lstm_p[l][3]).reshape(1, G)
                         for l in range(1, L)])                              # (L-1, 1, 4H)
    fc1_wt = params["fc1_w"].T                                 # (H, 2H)
    fc1_b = params["fc1_b"].reshape(1, -1)                     # (1, 2H)
    fc_wt = params["fc_w"].T                                   # (2H, out)
    fc_b = params["fc_b"].reshape(1, -1)                       # (1, out)

    # time-major flatten so row index = t*B + b  (all in-kernel matmuls stay 2-D)
    x_flat = jnp.transpose(x, (1, 0, 2)).reshape(T * B, I)     # (T*B, I)

    def kernel(*args):
        if L > 1:
            (x_ref, h0_ref, c0_ref, wih0_ref, b0_ref, whh_ref, wihr_ref, br_ref,
             fc1w_ref, fc1b_ref, fcw_ref, fcb_ref,
             out_ref, hn_ref, cn_ref,
             r_scr, g_scr) = args
        else:
            (x_ref, h0_ref, c0_ref, wih0_ref, b0_ref, whh_ref,
             fc1w_ref, fc1b_ref, fcw_ref, fcb_ref,
             out_ref, hn_ref, cn_ref,
             r_scr, g_scr) = args
            wihr_ref = br_ref = None

        def cell(gates, c_prev):
            # PyTorch gate order [i, f, g, o]; gates is (B, 4H)
            i_g = jax.nn.sigmoid(gates[:, 0 * H:1 * H])
            f_g = jax.nn.sigmoid(gates[:, 1 * H:2 * H])
            g_g = jnp.tanh(gates[:, 2 * H:3 * H])
            o_g = jax.nn.sigmoid(gates[:, 3 * H:4 * H])
            c_new = f_g * c_prev + i_g * g_g
            h_new = o_g * jnp.tanh(c_new)
            return h_new, c_new

        # Layer-0 input projection for ALL timesteps in one MXU matmul,
        # biases pre-summed into b0 (hoisted off the serial recurrence).
        g_scr[...] = (jnp.dot(x_ref[...], wih0_ref[...],
                              preferred_element_type=jnp.float32) + b0_ref[...])

        h_last = None
        for l in range(L):                       # layers fused in one kernel
            whh = whh_ref[l]                     # (H, 4H), pre-transposed
            h_prev = h0_ref[l]                   # (B, H)
            c_prev = c0_ref[l]                   # (B, H)
            is_last = (l == L - 1)

            # Serial recurrence: only h_prev @ W_hh^T + cell on the critical
            # path. T is small and static -> full static unroll.
            for t in range(T):
                gates = g_scr[pl.ds(t * B, B), :] + jnp.dot(
                    h_prev, whh, preferred_element_type=jnp.float32)
                h_prev, c_prev = cell(gates, c_prev)
                if not is_last:
                    r_scr[pl.ds(t * B, B), :] = h_prev

            # only the t == T-1 state matters for hn/cn (single write here)
            hn_ref[l] = h_prev
            cn_ref[l] = c_prev
            h_last = h_prev

            if not is_last:
                # Next layer's input projection, batched over all T steps
                # (one MXU call instead of T tiny ones).
                g_scr[...] = (jnp.dot(r_scr[...], wihr_ref[l],
                                      preferred_element_type=jnp.float32)
                              + br_ref[l])

        # FC head on the final hidden state only:
        # output.view(B, -1, 5)[:, -1] == fc(fc1(h_n of the last layer)).
        hdd = (jnp.dot(h_last, fc1w_ref[...], preferred_element_type=jnp.float32)
               + fc1b_ref[...])
        out = (jnp.dot(hdd, fcw_ref[...], preferred_element_type=jnp.float32)
               + fcb_ref[...])
        out_ref[...] = out.astype(out_ref.dtype)

    inputs = [x_flat, h0, c0, wih0_t, b0, whh_t]
    if L > 1:
        inputs += [wih_r_t, b_r]
    inputs += [fc1_wt, fc1_b, fc_wt, fc_b]

    out, h_n, c_n = pl.pallas_call(
        kernel,
        out_shape=[
            jax.ShapeDtypeStruct((B, output_size), jnp.float32),
            jax.ShapeDtypeStruct((L, B, H), jnp.float32),
            jax.ShapeDtypeStruct((L, B, H), jnp.float32),
        ],
        scratch_shapes=[
            pltpu.VMEM((T * B, H), jnp.float32),   # current layer's r_out (time-major flat)
            pltpu.VMEM((T * B, G), jnp.float32),   # current layer's precomputed input gates
        ],
    )(*inputs)
    return out, (h_n, c_n)


# ---------------------------------------------------------------------------
# Pure-JAX reference (mirrors the PyTorch module exactly) for a sanity check
# ---------------------------------------------------------------------------
def lstm_forward_ref(x, hidden, params, hidden_dim, n_layers, output_size):
    h0, c0 = hidden
    B, T, _ = x.shape
    H = hidden_dim
    layer_in = x
    h_ns, c_ns = [], []
    for l in range(n_layers):
        w_ih, w_hh, b_ih, b_hh = params["lstm"][l]
        h, c = h0[l], c0[l]
        outs = []
        for t in range(T):
            g = layer_in[:, t] @ w_ih.T + h @ w_hh.T + b_ih + b_hh
            i_g = jax.nn.sigmoid(g[:, :H])
            f_g = jax.nn.sigmoid(g[:, H:2 * H])
            g_g = jnp.tanh(g[:, 2 * H:3 * H])
            o_g = jax.nn.sigmoid(g[:, 3 * H:])
            c = f_g * c + i_g * g_g
            h = o_g * jnp.tanh(c)
            outs.append(h)
        layer_in = jnp.stack(outs, axis=1)          # (B, T, H)
        h_ns.append(h)
        c_ns.append(c)
    r_flat = layer_in.reshape(-1, H)
    o1 = r_flat @ params["fc1_w"].T + params["fc1_b"]
    o2 = o1 @ params["fc_w"].T + params["fc_b"]
    out = o2.reshape(B, -1, 5)[:, -1]
    return out, (jnp.stack(h_ns), jnp.stack(c_ns))


# ---------------------------------------------------------------------------
# Deterministic parameter init (shapes match nn.LSTM / nn.Linear)
# ---------------------------------------------------------------------------
def init_params(key, input_size, hidden_dim, n_layers, output_size):
    k = 1.0 / jnp.sqrt(jnp.float32(hidden_dim))
    keys = jax.random.split(key, 4 * n_layers + 6)
    params = {"lstm": []}
    idx = 0
    for l in range(n_layers):
        in_sz = input_size if l == 0 else hidden_dim
        w_ih = jax.random.uniform(keys[idx], (4 * hidden_dim, in_sz), jnp.float32, -k, k); idx += 1
        w_hh = jax.random.uniform(keys[idx], (4 * hidden_dim, hidden_dim), jnp.float32, -k, k); idx += 1
        b_ih = jax.random.uniform(keys[idx], (4 * hidden_dim,), jnp.float32, -k, k); idx += 1
        b_hh = jax.random.uniform(keys[idx], (4 * hidden_dim,), jnp.float32, -k, k); idx += 1
        params["lstm"].append((w_ih, w_hh, b_ih, b_hh))
    k1 = 1.0 / jnp.sqrt(jnp.float32(hidden_dim))
    params["fc1_w"] = jax.random.uniform(keys[idx], (2 * hidden_dim, hidden_dim), jnp.float32, -k1, k1); idx += 1
    params["fc1_b"] = jax.random.uniform(keys[idx], (2 * hidden_dim,), jnp.float32, -k1, k1); idx += 1
    k2 = 1.0 / jnp.sqrt(jnp.float32(2 * hidden_dim))
    params["fc_w"] = jax.random.uniform(keys[idx], (output_size, 2 * hidden_dim), jnp.float32, -k2, k2); idx += 1
    params["fc_b"] = jax.random.uniform(keys[idx], (output_size,), jnp.float32, -k2, k2); idx += 1
    # fc2 (Linear(input_size, output_size)) exists in __init__ but is unused in forward.
    k3 = 1.0 / jnp.sqrt(jnp.float32(input_size))
    params["fc2_w"] = jax.random.uniform(keys[idx], (output_size, input_size), jnp.float32, -k3, k3); idx += 1
    params["fc2_b"] = jax.random.uniform(keys[idx], (output_size,), jnp.float32, -k3, k3); idx += 1
    return params


if __name__ == "__main__":
    # Small shapes consistent with the module: output_size must be 5 (view(..., 5) in forward).
    batch, seq_len = 2, 8
    input_size, hidden_dim, n_layers, output_size = 4, 32, 2, 5

    key = jax.random.PRNGKey(0)
    kx, kp = jax.random.split(key)
    x = jax.random.normal(kx, (batch, seq_len, input_size), dtype=jnp.float32)
    params = init_params(kp, input_size, hidden_dim, n_layers, output_size)

    # init_hidden: zeros of shape (n_layers, batch, hidden_dim)
    h0 = jnp.zeros((n_layers, batch, hidden_dim), jnp.float32)
    c0 = jnp.zeros((n_layers, batch, hidden_dim), jnp.float32)

    output, (h_n, c_n) = lstm_forward(x, (h0, c0), params, hidden_dim, n_layers, output_size)
    jax.block_until_ready((output, h_n, c_n))

    assert output.shape == (batch, output_size)
    assert h_n.shape == (n_layers, batch, hidden_dim)
    assert c_n.shape == (n_layers, batch, hidden_dim)

    # sanity check vs a pure-JAX reference (loose tol: different matmul precision paths)
    out_ref, (hn_ref, cn_ref) = lstm_forward_ref(
        x, (h0, c0), params, hidden_dim, n_layers, output_size)
    assert jnp.allclose(output, out_ref, rtol=2e-2, atol=2e-2)
    assert jnp.allclose(h_n, hn_ref, rtol=2e-2, atol=2e-2)
    assert jnp.allclose(c_n, cn_ref, rtol=2e-2, atol=2e-2)

    print("KERNEL_OK")
</pallas_src>

<mosaic_0001>
module attributes {stable_mosaic.version = 11 : i64} {
  func.func @kernel(%arg0: memref<16x4xf32, #tpu.memory_space<vmem>>, %arg1: memref<2x2x32xf32, #tpu.memory_space<vmem>>, %arg2: memref<2x2x32xf32, #tpu.memory_space<vmem>>, %arg3: memref<4x128xf32, #tpu.memory_space<vmem>>, %arg4: memref<1x128xf32, #tpu.memory_space<vmem>>, %arg5: memref<2x32x128xf32, #tpu.memory_space<vmem>>, %arg6: memref<1x32x128xf32, #tpu.memory_space<vmem>>, %arg7: memref<1x1x128xf32, #tpu.memory_space<vmem>>, %arg8: memref<32x64xf32, #tpu.memory_space<vmem>>, %arg9: memref<1x64xf32, #tpu.memory_space<vmem>>, %arg10: memref<64x5xf32, #tpu.memory_space<vmem>>, %arg11: memref<1x5xf32, #tpu.memory_space<vmem>>, %arg12: memref<2x5xf32, #tpu.memory_space<vmem>>, %arg13: memref<2x2x32xf32, #tpu.memory_space<vmem>>, %arg14: memref<2x2x32xf32, #tpu.memory_space<vmem>>, %arg15: memref<16x32xf32, #tpu.memory_space<vmem>>, %arg16: memref<16x128xf32, #tpu.memory_space<vmem>>) attributes {dimension_semantics = [], scalar_prefetch = 0 : i64, scratch_operands = 2 : i64, tpu.core_type = #tpu.core_type<tc>} {
    %c0 = arith.constant 0 : index
    %c0_0 = arith.constant 0 : index
    %0 = vector.load %arg0[%c0, %c0_0] : memref<16x4xf32, #tpu.memory_space<vmem>>, vector<16x4xf32>
    %c0_1 = arith.constant 0 : index
    %c0_2 = arith.constant 0 : index
    %1 = vector.load %arg3[%c0_1, %c0_2] : memref<4x128xf32, #tpu.memory_space<vmem>>, vector<4x128xf32>
    %cst = arith.constant dense<0.000000e+00> : vector<16x128xf32>
    %2 = tpu.matmul %0, %1, %cst {dimension_numbers = #tpu.dot_dimension_numbers<[1], [0], [0], [1], [0, 0, 1, 1], [], []>} : vector<16x4xf32>, vector<4x128xf32>, vector<16x128xf32> -> vector<16x128xf32>
    %c0_3 = arith.constant 0 : index
    %c0_4 = arith.constant 0 : index
    %3 = vector.load %arg4[%c0_3, %c0_4] : memref<1x128xf32, #tpu.memory_space<vmem>>, vector<1x128xf32>
    %4 = vector.broadcast %3 : vector<1x128xf32> to vector<16x128xf32>
    %5 = arith.addf %2, %4 : vector<16x128xf32>
    %c0_5 = arith.constant 0 : index
    %c0_6 = arith.constant 0 : index
    %6 = vector.load %arg16[%c0_5, %c0_6] : memref<16x128xf32, #tpu.memory_space<vmem>>, vector<16x128xf32>
    tpu.vector_store %arg16[%c0_5, %c0_6], %5 {strides = array<i32>} : memref<16x128xf32, #tpu.memory_space<vmem>>, vector<16x128xf32>,
    %c0_7 = arith.constant 0 : index
    %c0_8 = arith.constant 0 : index
    %c0_9 = arith.constant 0 : index
    %7 = vector.load %arg5[%c0_7, %c0_8, %c0_9] : memref<2x32x128xf32, #tpu.memory_space<vmem>>, vector<1x32x128xf32>
    %8 = vector.shape_cast %7 : vector<1x32x128xf32> to vector<32x128xf32>
    %c0_10 = arith.constant 0 : index
    %c0_11 = arith.constant 0 : index
    %c0_12 = arith.constant 0 : index
    %9 = vector.load %arg1[%c0_10, %c0_11, %c0_12] : memref<2x2x32xf32, #tpu.memory_space<vmem>>, vector<1x2x32xf32>
    %10 = vector.shape_cast %9 : vector<1x2x32xf32> to vector<2x32xf32>
    %c0_13 = arith.constant 0 : index
    %c0_14 = arith.constant 0 : index
    %c0_15 = arith.constant 0 : index
    %11 = vector.load %arg2[%c0_13, %c0_14, %c0_15] : memref<2x2x32xf32, #tpu.memory_space<vmem>>, vector<1x2x32xf32>
    %12 = vector.shape_cast %11 : vector<1x2x32xf32> to vector<2x32xf32>
    %c0_16 = arith.constant 0 : index
    %c0_17 = arith.constant 0 : index
    %13 = vector.load %arg16[%c0_16, %c0_17] : memref<16x128xf32, #tpu.memory_space<vmem>>, vector<2x128xf32>
    %cst_18 = arith.constant dense<0.000000e+00> : vector<2x128xf32>
    %14 = tpu.matmul %10, %8, %cst_18 {dimension_numbers = #tpu.dot_dimension_numbers<[1], [0], [0], [1], [0, 0, 1, 1], [], []>} : vector<2x32xf32>, vector<32x128xf32>, vector<2x128xf32> -> vector<2x128xf32>
    %15 = arith.addf %13, %14 : vector<2x128xf32>
    %16 = vector.extract_strided_slice %15 {offsets = [0, 0], sizes = [2, 32], strides = [1, 1]} : vector<2x128xf32> to vector<2x32xf32>
    %17 = arith.negf %16 : vector<2x32xf32>
    %18 = math.exp %17 : vector<2x32xf32>
    %cst_19 = arith.constant 1.000000e+00 : f32
    %19 = vector.broadcast %cst_19 : f32 to vector<2x32xf32>
    %20 = arith.addf %19, %18 : vector<2x32xf32>
    %21 = arith.divf %19, %20 : vector<2x32xf32>
    %22 = vector.extract_strided_slice %15 {offsets = [0, 32], sizes = [2, 32], strides = [1, 1]} : vector<2x128xf32> to vector<2x32xf32>
    %23 = arith.negf %22 : vector<2x32xf32>
    %24 = math.exp %23 : vector<2x32xf32>
    %cst_20 = arith.constant 1.000000e+00 : f32
    %25 = vector.broadcast %cst_20 : f32 to vector<2x32xf32>
    %26 = arith.addf %25, %24 : vector<2x32xf32>
    %27 = arith.divf %25, %26 : vector<2x32xf32>
    %28 = vector.extract_strided_slice %15 {offsets = [0, 64], sizes = [2, 32], strides = [1, 1]} : vector<2x128xf32> to vector<2x32xf32>
    %29 = math.tanh %28 : vector<2x32xf32>
    %30 = vector.extract_strided_slice %15 {offsets = [0, 96], sizes = [2, 32], strides = [1, 1]} : vector<2x128xf32> to vector<2x32xf32>
    %31 = arith.negf %30 : vector<2x32xf32>
    %32 = math.exp %31 : vector<2x32xf32>
    %cst_21 = arith.constant 1.000000e+00 : f32
    %33 = vector.broadcast %cst_21 : f32 to vector<2x32xf32>
    %34 = arith.addf %33, %32 : vector<2x32xf32>
    %35 = arith.divf %33, %34 : vector<2x32xf32>
    %36 = arith.mulf %27, %12 : vector<2x32xf32>
    %37 = arith.mulf %21, %29 : vector<2x32xf32>
    %38 = arith.addf %36, %37 : vector<2x32xf32>
    %39 = math.tanh %38 : vector<2x32xf32>
    %40 = arith.mulf %35, %39 : vector<2x32xf32>
    %c0_22 = arith.constant 0 : index
    %c0_23 = arith.constant 0 : index
    %41 = vector.load %arg15[%c0_22, %c0_23] : memref<16x32xf32, #tpu.memory_space<vmem>>, vector<2x32xf32>
    tpu.vector_store %arg15[%c0_22, %c0_23], %40 {strides = array<i32>} : memref<16x32xf32, #tpu.memory_space<vmem>>, vector<2x32xf32>,
    %c2 = arith.constant 2 : index
    %c0_24 = arith.constant 0 : index
    %42 = vector.load %arg16[%c2, %c0_24] : memref<16x128xf32, #tpu.memory_space<vmem>>, vector<2x128xf32>
    %cst_25 = arith.constant dense<0.000000e+00> : vector<2x128xf32>
    %43 = tpu.matmul %40, %8, %cst_25 {dimension_numbers = #tpu.dot_dimension_numbers<[1], [0], [0], [1], [0, 0, 1, 1], [], []>} : vector<2x32xf32>, vector<32x128xf32>, vector<2x128xf32> -> vector<2x128xf32>
    %44 = arith.addf %42, %43 : vector<2x128xf32>
    %45 = vector.extract_strided_slice %44 {offsets = [0, 0], sizes = [2, 32], strides = [1, 1]} : vector<2x128xf32> to vector<2x32xf32>
    %46 = arith.negf %45 : vector<2x32xf32>
    %47 = math.exp %46 : vector<2x32xf32>
    %cst_26 = arith.constant 1.000000e+00 : f32
    %48 = vector.broadcast %cst_26 : f32 to vector<2x32xf32>
    %49 = arith.addf %48, %47 : vector<2x32xf32>
    %50 = arith.divf %48, %49 : vector<2x32xf32>
    %51 = vector.extract_strided_slice %44 {offsets = [0, 32], sizes = [2, 32], strides = [1, 1]} : vector<2x128xf32> to vector<2x32xf32>
    %52 = arith.negf %51 : vector<2x32xf32>
    %53 = math.exp %52 : vector<2x32xf32>
    %cst_27 = arith.constant 1.000000e+00 : f32
    %54 = vector.broadcast %cst_27 : f32 to vector<2x32xf32>
    %55 = arith.addf %54, %53 : vector<2x32xf32>
    %56 = arith.divf %54, %55 : vector<2x32xf32>
    %57 = vector.extract_strided_slice %44 {offsets = [0, 64], sizes = [2, 32], strides = [1, 1]} : vector<2x128xf32> to vector<2x32xf32>
    %58 = math.tanh %57 : vector<2x32xf32>
    %59 = vector.extract_strided_slice %44 {offsets = [0, 96], sizes = [2, 32], strides = [1, 1]} : vector<2x128xf32> to vector<2x32xf32>
    %60 = arith.negf %59 : vector<2x32xf32>
    %61 = math.exp %60 : vector<2x32xf32>
    %cst_28 = arith.constant 1.000000e+00 : f32
    %62 = vector.broadcast %cst_28 : f32 to vector<2x32xf32>
    %63 = arith.addf %62, %61 : vector<2x32xf32>
    %64 = arith.divf %62, %63 : vector<2x32xf32>
    %65 = arith.mulf %56, %38 : vector<2x32xf32>
    %66 = arith.mulf %50, %58 : vector<2x32xf32>
    %67 = arith.addf %65, %66 : vector<2x32xf32>
    %68 = math.tanh %67 : vector<2x32xf32>
    %69 = arith.mulf %64, %68 : vector<2x32xf32>
    %c2_29 = arith.constant 2 : index
    %c0_30 = arith.constant 0 : index
    %70 = vector.load %arg15[%c2_29, %c0_30] : memref<16x32xf32, #tpu.memory_space<vmem>>, vector<2x32xf32>
    tpu.vector_store %arg15[%c2_29, %c0_30], %69 {strides = array<i32>} : memref<16x32xf32, #tpu.memory_space<vmem>>, vector<2x32xf32>,
    %c4 = arith.constant 4 : index
    %c0_31 = arith.constant 0 : index
    %71 = vector.load %arg16[%c4, %c0_31] : memref<16x128xf32, #tpu.memory_space<vmem>>, vector<2x128xf32>
    %cst_32 = arith.constant dense<0.000000e+00> : vector<2x128xf32>
    %72 = tpu.matmul %69, %8, %cst_32 {dimension_numbers = #tpu.dot_dimension_numbers<[1], [0], [0], [1], [0, 0, 1, 1], [], []>} : vector<2x32xf32>, vector<32x128xf32>, vector<2x128xf32> -> vector<2x128xf32>
    %73 = arith.addf %71, %72 : vector<2x128xf32>
    %74 = vector.extract_strided_slice %73 {offsets = [0, 0], sizes = [2, 32], strides = [1, 1]} : vector<2x128xf32> to vector<2x32xf32>
    %75 = arith.negf %74 : vector<2x32xf32>
    %76 = math.exp %75 : vector<2x32xf32>
    %cst_33 = arith.constant 1.000000e+00 : f32
    %77 = vector.broadcast %cst_33 : f32 to vector<2x32xf32>
    %78 = arith.addf %77, %76 : vector<2x32xf32>
    %79 = arith.divf %77, %78 : vector<2x32xf32>
    %80 = vector.extract_strided_slice %73 {offsets = [0, 32], sizes = [2, 32], strides = [1, 1]} : vector<2x128xf32> to vector<2x32xf32>
    %81 = arith.negf %80 : vector<2x32xf32>
    %82 = math.exp %81 : vector<2x32xf32>
    %cst_34 = arith.constant 1.000000e+00 : f32
    %83 = vector.broadcast %cst_34 : f32 to vector<2x32xf32>
    %84 = arith.addf %83, %82 : vector<2x32xf32>
    %85 = arith.divf %83, %84 : vector<2x32xf32>
    %86 = vector.extract_strided_slice %73 {offsets = [0, 64], sizes = [2, 32], strides = [1, 1]} : vector<2x128xf32> to vector<2x32xf32>
    %87 = math.tanh %86 : vector<2x32xf32>
    %88 = vector.extract_strided_slice %73 {offsets = [0, 96], sizes = [2, 32], strides = [1, 1]} : vector<2x128xf32> to vector<2x32xf32>
    %89 = arith.negf %88 : vector<2x32xf32>
    %90 = math.exp %89 : vector<2x32xf32>
    %cst_35 = arith.constant 1.000000e+00 : f32
    %91 = vector.broadcast %cst_35 : f32 to vector<2x32xf32>
    %92 = arith.addf %91, %90 : vector<2x32xf32>
    %93 = arith.divf %91, %92 : vector<2x32xf32>
    %94 = arith.mulf %85, %67 : vector<2x32xf32>
    %95 = arith.mulf %79, %87 : vector<2x32xf32>
    %96 = arith.addf %94, %95 : vector<2x32xf32>
    %97 = math.tanh %96 : vector<2x32xf32>
    %98 = arith.mulf %93, %97 : vector<2x32xf32>
    %c4_36 = arith.constant 4 : index
    %c0_37 = arith.constant 0 : index
    %99 = vector.load %arg15[%c4_36, %c0_37] : memref<16x32xf32, #tpu.memory_space<vmem>>, vector<2x32xf32>
    tpu.vector_store %arg15[%c4_36, %c0_37], %98 {strides = array<i32>} : memref<16x32xf32, #tpu.memory_space<vmem>>, vector<2x32xf32>,
    %c6 = arith.constant 6 : index
    %c0_38 = arith.constant 0 : index
    %100 = vector.load %arg16[%c6, %c0_38] : memref<16x128xf32, #tpu.memory_space<vmem>>, vector<2x128xf32>
    %cst_39 = arith.constant dense<0.000000e+00> : vector<2x128xf32>
    %101 = tpu.matmul %98, %8, %cst_39 {dimension_numbers = #tpu.dot_dimension_numbers<[1], [0], [0], [1], [0, 0, 1, 1], [], []>} : vector<2x32xf32>, vector<32x128xf32>, vector<2x128xf32> -> vector<2x128xf32>
    %102 = arith.addf %100, %101 : vector<2x128xf32>
    %103 = vector.extract_strided_slice %102 {offsets = [0, 0], sizes = [2, 32], strides = [1, 1]} : vector<2x128xf32> to vector<2x32xf32>
    %104 = arith.negf %103 : vector<2x32xf32>
    %105 = math.exp %104 : vector<2x32xf32>
    %cst_40 = arith.constant 1.000000e+00 : f32
    %106 = vector.broadcast %cst_40 : f32 to vector<2x32xf32>
    %107 = arith.addf %106, %105 : vector<2x32xf32>
    %108 = arith.divf %106, %107 : vector<2x32xf32>
    %109 = vector.extract_strided_slice %102 {offsets = [0, 32], sizes = [2, 32], strides = [1, 1]} : vector<2x128xf32> to vector<2x32xf32>
    %110 = arith.negf %109 : vector<2x32xf32>
    %111 = math.exp %110 : vector<2x32xf32>
    %cst_41 = arith.constant 1.000000e+00 : f32
    %112 = vector.broadcast %cst_41 : f32 to vector<2x32xf32>
    %113 = arith.addf %112, %111 : vector<2x32xf32>
    %114 = arith.divf %112, %113 : vector<2x32xf32>
    %115 = vector.extract_strided_slice %102 {offsets = [0, 64], sizes = [2, 32], strides = [1, 1]} : vector<2x128xf32> to vector<2x32xf32>
    %116 = math.tanh %115 : vector<2x32xf32>
    %117 = vector.extract_strided_slice %102 {offsets = [0, 96], sizes = [2, 32], strides = [1, 1]} : vector<2x128xf32> to vector<2x32xf32>
    %118 = arith.negf %117 : vector<2x32xf32>
    %119 = math.exp %118 : vector<2x32xf32>
    %cst_42 = arith.constant 1.000000e+00 : f32
    %120 = vector.broadcast %cst_42 : f32 to vector<2x32xf32>
    %121 = arith.addf %120, %119 : vector<2x32xf32>
    %122 = arith.divf %120, %121 : vector<2x32xf32>
    %123 = arith.mulf %114, %96 : vector<2x32xf32>
    %124 = arith.mulf %108, %116 : vector<2x32xf32>
    %125 = arith.addf %123, %124 : vector<2x32xf32>
    %126 = math.tanh %125 : vector<2x32xf32>
    %127 = arith.mulf %122, %126 : vector<2x32xf32>
    %c6_43 = arith.constant 6 : index
    %c0_44 = arith.constant 0 : index
    %128 = vector.load %arg15[%c6_43, %c0_44] : memref<16x32xf32, #tpu.memory_space<vmem>>, vector<2x32xf32>
    tpu.vector_store %arg15[%c6_43, %c0_44], %127 {strides = array<i32>} : memref<16x32xf32, #tpu.memory_space<vmem>>, vector<2x32xf32>,
    %c8 = arith.constant 8 : index
    %c0_45 = arith.constant 0 : index
    %129 = vector.load %arg16[%c8, %c0_45] : memref<16x128xf32, #tpu.memory_space<vmem>>, vector<2x128xf32>
    %cst_46 = arith.constant dense<0.000000e+00> : vector<2x128xf32>
    %130 = tpu.matmul %127, %8, %cst_46 {dimension_numbers = #tpu.dot_dimension_numbers<[1], [0], [0], [1], [0, 0, 1, 1], [], []>} : vector<2x32xf32>, vector<32x128xf32>, vector<2x128xf32> -> vector<2x128xf32>
    %131 = arith.addf %129, %130 : vector<2x128xf32>
    %132 = vector.extract_strided_slice %131 {offsets = [0, 0], sizes = [2, 32], strides = [1, 1]} : vector<2x128xf32> to vector<2x32xf32>
    %133 = arith.negf %132 : vector<2x32xf32>
    %134 = math.exp %133 : vector<2x32xf32>
    %cst_47 = arith.constant 1.000000e+00 : f32
    %135 = vector.broadcast %cst_47 : f32 to vector<2x32xf32>
    %136 = arith.addf %135, %134 : vector<2x32xf32>
    %137 = arith.divf %135, %136 : vector<2x32xf32>
    %138 = vector.extract_strided_slice %131 {offsets = [0, 32], sizes = [2, 32], strides = [1, 1]} : vector<2x128xf32> to vector<2x32xf32>
    %139 = arith.negf %138 : vector<2x32xf32>
    %140 = math.exp %139 : vector<2x32xf32>
    %cst_48 = arith.constant 1.000000e+00 : f32
    %141 = vector.broadcast %cst_48 : f32 to vector<2x32xf32>
    %142 = arith.addf %141, %140 : vector<2x32xf32>
    %143 = arith.divf %141, %142 : vector<2x32xf32>
    %144 = vector.extract_strided_slice %131 {offsets = [0, 64], sizes = [2, 32], strides = [1, 1]} : vector<2x128xf32> to vector<2x32xf32>
    %145 = math.tanh %144 : vector<2x32xf32>
    %146 = vector.extract_strided_slice %131 {offsets = [0, 96], sizes = [2, 32], strides = [1, 1]} : vector<2x128xf32> to vector<2x32xf32>
    %147 = arith.negf %146 : vector<2x32xf32>
    %148 = math.exp %147 : vector<2x32xf32>
    %cst_49 = arith.constant 1.000000e+00 : f32
    %149 = vector.broadcast %cst_49 : f32 to vector<2x32xf32>
    %150 = arith.addf %149, %148 : vector<2x32xf32>
    %151 = arith.divf %149, %150 : vector<2x32xf32>
    %152 = arith.mulf %143, %125 : vector<2x32xf32>
    %153 = arith.mulf %137, %145 : vector<2x32xf32>
    %154 = arith.addf %152, %153 : vector<2x32xf32>
    %155 = math.tanh %154 : vector<2x32xf32>
    %156 = arith.mulf %151, %155 : vector<2x32xf32>
    %c8_50 = arith.constant 8 : index
    %c0_51 = arith.constant 0 : index
    %157 = vector.load %arg15[%c8_50, %c0_51] : memref<16x32xf32, #tpu.memory_space<vmem>>, vector<2x32xf32>
    tpu.vector_store %arg15[%c8_50, %c0_51], %156 {strides = array<i32>} : memref<16x32xf32, #tpu.memory_space<vmem>>, vector<2x32xf32>,
    %c10 = arith.constant 10 : index
    %c0_52 = arith.constant 0 : index
    %158 = vector.load %arg16[%c10, %c0_52] : memref<16x128xf32, #tpu.memory_space<vmem>>, vector<2x128xf32>
    %cst_53 = arith.constant dense<0.000000e+00> : vector<2x128xf32>
    %159 = tpu.matmul %156, %8, %cst_53 {dimension_numbers = #tpu.dot_dimension_numbers<[1], [0], [0], [1], [0, 0, 1, 1], [], []>} : vector<2x32xf32>, vector<32x128xf32>, vector<2x128xf32> -> vector<2x128xf32>
    %160 = arith.addf %158, %159 : vector<2x128xf32>
    %161 = vector.extract_strided_slice %160 {offsets = [0, 0], sizes = [2, 32], strides = [1, 1]} : vector<2x128xf32> to vector<2x32xf32>
    %162 = arith.negf %161 : vector<2x32xf32>
    %163 = math.exp %162 : vector<2x32xf32>
    %cst_54 = arith.constant 1.000000e+00 : f32
    %164 = vector.broadcast %cst_54 : f32 to vector<2x32xf32>
    %165 = arith.addf %164, %163 : vector<2x32xf32>
    %166 = arith.divf %164, %165 : vector<2x32xf32>
    %167 = vector.extract_strided_slice %160 {offsets = [0, 32], sizes = [2, 32], strides = [1, 1]} : vector<2x128xf32> to vector<2x32xf32>
    %168 = arith.negf %167 : vector<2x32xf32>
    %169 = math.exp %168 : vector<2x32xf32>
    %cst_55 = arith.constant 1.000000e+00 : f32
    %170 = vector.broadcast %cst_55 : f32 to vector<2x32xf32>
    %171 = arith.addf %170, %169 : vector<2x32xf32>
    %172 = arith.divf %170, %171 : vector<2x32xf32>
    %173 = vector.extract_strided_slice %160 {offsets = [0, 64], sizes = [2, 32], strides = [1, 1]} : vector<2x128xf32> to vector<2x32xf32>
    %174 = math.tanh %173 : vector<2x32xf32>
    %175 = vector.extract_strided_slice %160 {offsets = [0, 96], sizes = [2, 32], strides = [1, 1]} : vector<2x128xf32> to vector<2x32xf32>
    %176 = arith.negf %175 : vector<2x32xf32>
    %177 = math.exp %176 : vector<2x32xf32>
    %cst_56 = arith.constant 1.000000e+00 : f32
    %178 = vector.broadcast %cst_56 : f32 to vector<2x32xf32>
    %179 = arith.addf %178, %177 : vector<2x32xf32>
    %180 = arith.divf %178, %179 : vector<2x32xf32>
    %181 = arith.mulf %172, %154 : vector<2x32xf32>
    %182 = arith.mulf %166, %174 : vector<2x32xf32>
    %183 = arith.addf %181, %182 : vector<2x32xf32>
    %184 = math.tanh %183 : vector<2x32xf32>
    %185 = arith.mulf %180, %184 : vector<2x32xf32>
    %c10_57 = arith.constant 10 : index
    %c0_58 = arith.constant 0 : index
    %186 = vector.load %arg15[%c10_57, %c0_58] : memref<16x32xf32, #tpu.memory_space<vmem>>, vector<2x32xf32>
    tpu.vector_store %arg15[%c10_57, %c0_58], %185 {strides = array<i32>} : memref<16x32xf32, #tpu.memory_space<vmem>>, vector<2x32xf32>,
    %c12 = arith.constant 12 : index
    %c0_59 = arith.constant 0 : index
    %187 = vector.load %arg16[%c12, %c0_59] : memref<16x128xf32, #tpu.memory_space<vmem>>, vector<2x128xf32>
    %cst_60 = arith.constant dense<0.000000e+00> : vector<2x128xf32>
    %188 = tpu.matmul %185, %8, %cst_60 {dimension_numbers = #tpu.dot_dimension_numbers<[1], [0], [0], [1], [0, 0, 1, 1], [], []>} : vector<2x32xf32>, vector<32x128xf32>, vector<2x128xf32> -> vector<2x128xf32>
    %189 = arith.addf %187, %188 : vector<2x128xf32>
    %190 = vector.extract_strided_slice %189 {offsets = [0, 0], sizes = [2, 32], strides = [1, 1]} : vector<2x128xf32> to vector<2x32xf32>
    %191 = arith.negf %190 : vector<2x32xf32>
    %192 = math.exp %191 : vector<2x32xf32>
    %cst_61 = arith.constant 1.000000e+00 : f32
    %193 = vector.broadcast %cst_61 : f32 to vector<2x32xf32>
    %194 = arith.addf %193, %192 : vector<2x32xf32>
    %195 = arith.divf %193, %194 : vector<2x32xf32>
    %196 = vector.extract_strided_slice %189 {offsets = [0, 32], sizes = [2, 32], strides = [1, 1]} : vector<2x128xf32> to vector<2x32xf32>
    %197 = arith.negf %196 : vector<2x32xf32>
    %198 = math.exp %197 : vector<2x32xf32>
    %cst_62 = arith.constant 1.000000e+00 : f32
    %199 = vector.broadcast %cst_62 : f32 to vector<2x32xf32>
    %200 = arith.addf %199, %198 : vector<2x32xf32>
    %201 = arith.divf %199, %200 : vector<2x32xf32>
    %202 = vector.extract_strided_slice %189 {offsets = [0, 64], sizes = [2, 32], strides = [1, 1]} : vector<2x128xf32> to vector<2x32xf32>
    %203 = math.tanh %202 : vector<2x32xf32>
    %204 = vector.extract_strided_slice %189 {offsets = [0, 96], sizes = [2, 32], strides = [1, 1]} : vector<2x128xf32> to vector<2x32xf32>
    %205 = arith.negf %204 : vector<2x32xf32>
    %206 = math.exp %205 : vector<2x32xf32>
    %cst_63 = arith.constant 1.000000e+00 : f32
    %207 = vector.broadcast %cst_63 : f32 to vector<2x32xf32>
    %208 = arith.addf %207, %206 : vector<2x32xf32>
    %209 = arith.divf %207, %208 : vector<2x32xf32>
    %210 = arith.mulf %201, %183 : vector<2x32xf32>
    %211 = arith.mulf %195, %203 : vector<2x32xf32>
    %212 = arith.addf %210, %211 : vector<2x32xf32>
    %213 = math.tanh %212 : vector<2x32xf32>
    %214 = arith.mulf %209, %213 : vector<2x32xf32>
    %c12_64 = arith.constant 12 : index
    %c0_65 = arith.constant 0 : index
    %215 = vector.load %arg15[%c12_64, %c0_65] : memref<16x32xf32, #tpu.memory_space<vmem>>, vector<2x32xf32>
    tpu.vector_store %arg15[%c12_64, %c0_65], %214 {strides = array<i32>} : memref<16x32xf32, #tpu.memory_space<vmem>>, vector<2x32xf32>,
    %c14 = arith.constant 14 : index
    %c0_66 = arith.constant 0 : index
    %216 = vector.load %arg16[%c14, %c0_66] : memref<16x128xf32, #tpu.memory_space<vmem>>, vector<2x128xf32>
    %cst_67 = arith.constant dense<0.000000e+00> : vector<2x128xf32>
    %217 = tpu.matmul %214, %8, %cst_67 {dimension_numbers = #tpu.dot_dimension_numbers<[1], [0], [0], [1], [0, 0, 1, 1], [], []>} : vector<2x32xf32>, vector<32x128xf32>, vector<2x128xf32> -> vector<2x128xf32>
    %218 = arith.addf %216, %217 : vector<2x128xf32>
    %219 = vector.extract_strided_slice %218 {offsets = [0, 0], sizes = [2, 32], strides = [1, 1]} : vector<2x128xf32> to vector<2x32xf32>
    %220 = arith.negf %219 : vector<2x32xf32>
    %221 = math.exp %220 : vector<2x32xf32>
    %cst_68 = arith.constant 1.000000e+00 : f32
    %222 = vector.broadcast %cst_68 : f32 to vector<2x32xf32>
    %223 = arith.addf %222, %221 : vector<2x32xf32>
    %224 = arith.divf %222, %223 : vector<2x32xf32>
    %225 = vector.extract_strided_slice %218 {offsets = [0, 32], sizes = [2, 32], strides = [1, 1]} : vector<2x128xf32> to vector<2x32xf32>
    %226 = arith.negf %225 : vector<2x32xf32>
    %227 = math.exp %226 : vector<2x32xf32>
    %cst_69 = arith.constant 1.000000e+00 : f32
    %228 = vector.broadcast %cst_69 : f32 to vector<2x32xf32>
    %229 = arith.addf %228, %227 : vector<2x32xf32>
    %230 = arith.divf %228, %229 : vector<2x32xf32>
    %231 = vector.extract_strided_slice %218 {offsets = [0, 64], sizes = [2, 32], strides = [1, 1]} : vector<2x128xf32> to vector<2x32xf32>
    %232 = math.tanh %231 : vector<2x32xf32>
    %233 = vector.extract_strided_slice %218 {offsets = [0, 96], sizes = [2, 32], strides = [1, 1]} : vector<2x128xf32> to vector<2x32xf32>
    %234 = arith.negf %233 : vector<2x32xf32>
    %235 = math.exp %234 : vector<2x32xf32>
    %cst_70 = arith.constant 1.000000e+00 : f32
    %236 = vector.broadcast %cst_70 : f32 to vector<2x32xf32>
    %237 = arith.addf %236, %235 : vector<2x32xf32>
    %238 = arith.divf %236, %237 : vector<2x32xf32>
    %239 = arith.mulf %230, %212 : vector<2x32xf32>
    %240 = arith.mulf %224, %232 : vector<2x32xf32>
    %241 = arith.addf %239, %240 : vector<2x32xf32>
    %242 = math.tanh %241 : vector<2x32xf32>
    %243 = arith.mulf %238, %242 : vector<2x32xf32>
    %c14_71 = arith.constant 14 : index
    %c0_72 = arith.constant 0 : index
    %244 = vector.load %arg15[%c14_71, %c0_72] : memref<16x32xf32, #tpu.memory_space<vmem>>, vector<2x32xf32>
    tpu.vector_store %arg15[%c14_71, %c0_72], %243 {strides = array<i32>} : memref<16x32xf32, #tpu.memory_space<vmem>>, vector<2x32xf32>,
    %c0_73 = arith.constant 0 : index
    %c0_74 = arith.constant 0 : index
    %c0_75 = arith.constant 0 : index
    %245 = vector.load %arg13[%c0_73, %c0_74, %c0_75] : memref<2x2x32xf32, #tpu.memory_space<vmem>>, vector<1x2x32xf32>
    %246 = vector.shape_cast %245 : vector<1x2x32xf32> to vector<2x32xf32>
    %247 = vector.shape_cast %243 : vector<2x32xf32> to vector<1x2x32xf32>
    tpu.vector_store %arg13[%c0_73, %c0_74, %c0_75], %247 {strides = array<i32>} : memref<2x2x32xf32, #tpu.memory_space<vmem>>, vector<1x2x32xf32>,
    %c0_76 = arith.constant 0 : index
    %c0_77 = arith.constant 0 : index
    %c0_78 = arith.constant 0 : index
    %248 = vector.load %arg14[%c0_76, %c0_77, %c0_78] : memref<2x2x32xf32, #tpu.memory_space<vmem>>, vector<1x2x32xf32>
    %249 = vector.shape_cast %248 : vector<1x2x32xf32> to vector<2x32xf32>
    %250 = vector.shape_cast %241 : vector<2x32xf32> to vector<1x2x32xf32>
    tpu.vector_store %arg14[%c0_76, %c0_77, %c0_78], %250 {strides = array<i32>} : memref<2x2x32xf32, #tpu.memory_space<vmem>>, vector<1x2x32xf32>,
    %c0_79 = arith.constant 0 : index
    %c0_80 = arith.constant 0 : index
    %251 = vector.load %arg15[%c0_79, %c0_80] : memref<16x32xf32, #tpu.memory_space<vmem>>, vector<16x32xf32>
    %c0_81 = arith.constant 0 : index
    %c0_82 = arith.constant 0 : index
    %c0_83 = arith.constant 0 : index
    %252 = vector.load %arg6[%c0_81, %c0_82, %c0_83] : memref<1x32x128xf32, #tpu.memory_space<vmem>>, vector<1x32x128xf32>
    %253 = vector.shape_cast %252 : vector<1x32x128xf32> to vector<32x128xf32>
    %cst_84 = arith.constant dense<0.000000e+00> : vector<16x128xf32>
    %254 = tpu.matmul %251, %253, %cst_84 {dimension_numbers = #tpu.dot_dimension_numbers<[1], [0], [0], [1], [0, 0, 1, 1], [], []>} : vector<16x32xf32>, vector<32x128xf32>, vector<16x128xf32> -> vector<16x128xf32>
    %c0_85 = arith.constant 0 : index
    %c0_86 = arith.constant 0 : index
    %c0_87 = arith.constant 0 : index
    %255 = vector.load %arg7[%c0_85, %c0_86, %c0_87] : memref<1x1x128xf32, #tpu.memory_space<vmem>>, vector<1x1x128xf32>
    %256 = vector.shape_cast %255 : vector<1x1x128xf32> to vector<1x128xf32>
    %257 = vector.broadcast %256 : vector<1x128xf32> to vector<16x128xf32>
    %258 = arith.addf %254, %257 : vector<16x128xf32>
    %c0_88 = arith.constant 0 : index
    %c0_89 = arith.constant 0 : index
    %259 = vector.load %arg16[%c0_88, %c0_89] : memref<16x128xf32, #tpu.memory_space<vmem>>, vector<16x128xf32>
    tpu.vector_store %arg16[%c0_88, %c0_89], %258 {strides = array<i32>} : memref<16x128xf32, #tpu.memory_space<vmem>>, vector<16x128xf32>,
    %c1 = arith.constant 1 : index
    %c0_90 = arith.constant 0 : index
    %c0_91 = arith.constant 0 : index
    %260 = vector.load %arg5[%c1, %c0_90, %c0_91] : memref<2x32x128xf32, #tpu.memory_space<vmem>>, vector<1x32x128xf32>
    %261 = vector.shape_cast %260 : vector<1x32x128xf32> to vector<32x128xf32>
    %c1_92 = arith.constant 1 : index
    %c0_93 = arith.constant 0 : index
    %c0_94 = arith.constant 0 : index
    %262 = vector.load %arg1[%c1_92, %c0_93, %c0_94] : memref<2x2x32xf32, #tpu.memory_space<vmem>>, vector<1x2x32xf32>
    %263 = vector.shape_cast %262 : vector<1x2x32xf32> to vector<2x32xf32>
    %c1_95 = arith.constant 1 : index
    %c0_96 = arith.constant 0 : index
    %c0_97 = arith.constant 0 : index
    %264 = vector.load %arg2[%c1_95, %c0_96, %c0_97] : memref<2x2x32xf32, #tpu.memory_space<vmem>>, vector<1x2x32xf32>
    %265 = vector.shape_cast %264 : vector<1x2x32xf32> to vector<2x32xf32>
    %c0_98 = arith.constant 0 : index
    %c0_99 = arith.constant 0 : index
    %266 = vector.load %arg16[%c0_98, %c0_99] : memref<16x128xf32, #tpu.memory_space<vmem>>, vector<2x128xf32>
    %cst_100 = arith.constant dense<0.000000e+00> : vector<2x128xf32>
    %267 = tpu.matmul %263, %261, %cst_100 {dimension_numbers = #tpu.dot_dimension_numbers<[1], [0], [0], [1], [0, 0, 1, 1], [], []>} : vector<2x32xf32>, vector<32x128xf32>, vector<2x128xf32> -> vector<2x128xf32>
    %268 = arith.addf %266, %267 : vector<2x128xf32>
    %269 = vector.extract_strided_slice %268 {offsets = [0, 0], sizes = [2, 32], strides = [1, 1]} : vector<2x128xf32> to vector<2x32xf32>
    %270 = arith.negf %269 : vector<2x32xf32>
    %271 = math.exp %270 : vector<2x32xf32>
    %cst_101 = arith.constant 1.000000e+00 : f32
    %272 = vector.broadcast %cst_101 : f32 to vector<2x32xf32>
    %273 = arith.addf %272, %271 : vector<2x32xf32>
    %274 = arith.divf %272, %273 : vector<2x32xf32>
    %275 = vector.extract_strided_slice %268 {offsets = [0, 32], sizes = [2, 32], strides = [1, 1]} : vector<2x128xf32> to vector<2x32xf32>
    %276 = arith.negf %275 : vector<2x32xf32>
    %277 = math.exp %276 : vector<2x32xf32>
    %cst_102 = arith.constant 1.000000e+00 : f32
    %278 = vector.broadcast %cst_102 : f32 to vector<2x32xf32>
    %279 = arith.addf %278, %277 : vector<2x32xf32>
    %280 = arith.divf %278, %279 : vector<2x32xf32>
    %281 = vector.extract_strided_slice %268 {offsets = [0, 64], sizes = [2, 32], strides = [1, 1]} : vector<2x128xf32> to vector<2x32xf32>
    %282 = math.tanh %281 : vector<2x32xf32>
    %283 = vector.extract_strided_slice %268 {offsets = [0, 96], sizes = [2, 32], strides = [1, 1]} : vector<2x128xf32> to vector<2x32xf32>
    %284 = arith.negf %283 : vector<2x32xf32>
    %285 = math.exp %284 : vector<2x32xf32>
    %cst_103 = arith.constant 1.000000e+00 : f32
    %286 = vector.broadcast %cst_103 : f32 to vector<2x32xf32>
    %287 = arith.addf %286, %285 : vector<2x32xf32>
    %288 = arith.divf %286, %287 : vector<2x32xf32>
    %289 = arith.mulf %280, %265 : vector<2x32xf32>
    %290 = arith.mulf %274, %282 : vector<2x32xf32>
    %291 = arith.addf %289, %290 : vector<2x32xf32>
    %292 = math.tanh %291 : vector<2x32xf32>
    %293 = arith.mulf %288, %292 : vector<2x32xf32>
    %c2_104 = arith.constant 2 : index
    %c0_105 = arith.constant 0 : index
    %294 = vector.load %arg16[%c2_104, %c0_105] : memref<16x128xf32, #tpu.memory_space<vmem>>, vector<2x128xf32>
    %cst_106 = arith.constant dense<0.000000e+00> : vector<2x128xf32>
    %295 = tpu.matmul %293, %261, %cst_106 {dimension_numbers = #tpu.dot_dimension_numbers<[1], [0], [0], [1], [0, 0, 1, 1], [], []>} : vector<2x32xf32>, vector<32x128xf32>, vector<2x128xf32> -> vector<2x128xf32>
    %296 = arith.addf %294, %295 : vector<2x128xf32>
    %297 = vector.extract_strided_slice %296 {offsets = [0, 0], sizes = [2, 32], strides = [1, 1]} : vector<2x128xf32> to vector<2x32xf32>
    %298 = arith.negf %297 : vector<2x32xf32>
    %299 = math.exp %298 : vector<2x32xf32>
    %cst_107 = arith.constant 1.000000e+00 : f32
    %300 = vector.broadcast %cst_107 : f32 to vector<2x32xf32>
    %301 = arith.addf %300, %299 : vector<2x32xf32>
    %302 = arith.divf %300, %301 : vector<2x32xf32>
    %303 = vector.extract_strided_slice %296 {offsets = [0, 32], sizes = [2, 32], strides = [1, 1]} : vector<2x128xf32> to vector<2x32xf32>
    %304 = arith.negf %303 : vector<2x32xf32>
    %305 = math.exp %304 : vector<2x32xf32>
    %cst_108 = arith.constant 1.000000e+00 : f32
    %306 = vector.broadcast %cst_108 : f32 to vector<2x32xf32>
    %307 = arith.addf %306, %305 : vector<2x32xf32>
    %308 = arith.divf %306, %307 : vector<2x32xf32>
    %309 = vector.extract_strided_slice %296 {offsets = [0, 64], sizes = [2, 32], strides = [1, 1]} : vector<2x128xf32> to vector<2x32xf32>
    %310 = math.tanh %309 : vector<2x32xf32>
    %311 = vector.extract_strided_slice %296 {offsets = [0, 96], sizes = [2, 32], strides = [1, 1]} : vector<2x128xf32> to vector<2x32xf32>
    %312 = arith.negf %311 : vector<2x32xf32>
    %313 = math.exp %312 : vector<2x32xf32>
    %cst_109 = arith.constant 1.000000e+00 : f32
    %314 = vector.broadcast %cst_109 : f32 to vector<2x32xf32>
    %315 = arith.addf %314, %313 : vector<2x32xf32>
    %316 = arith.divf %314, %315 : vector<2x32xf32>
    %317 = arith.mulf %308, %291 : vector<2x32xf32>
    %318 = arith.mulf %302, %310 : vector<2x32xf32>
    %319 = arith.addf %317, %318 : vector<2x32xf32>
    %320 = math.tanh %319 : vector<2x32xf32>
    %321 = arith.mulf %316, %320 : vector<2x32xf32>
    %c4_110 = arith.constant 4 : index
    %c0_111 = arith.constant 0 : index
    %322 = vector.load %arg16[%c4_110, %c0_111] : memref<16x128xf32, #tpu.memory_space<vmem>>, vector<2x128xf32>
    %cst_112 = arith.constant dense<0.000000e+00> : vector<2x128xf32>
    %323 = tpu.matmul %321, %261, %cst_112 {dimension_numbers = #tpu.dot_dimension_numbers<[1], [0], [0], [1], [0, 0, 1, 1], [], []>} : vector<2x32xf32>, vector<32x128xf32>, vector<2x128xf32> -> vector<2x128xf32>
    %324 = arith.addf %322, %323 : vector<2x128xf32>
    %325 = vector.extract_strided_slice %324 {offsets = [0, 0], sizes = [2, 32], strides = [1, 1]} : vector<2x128xf32> to vector<2x32xf32>
    %326 = arith.negf %325 : vector<2x32xf32>
    %327 = math.exp %326 : vector<2x32xf32>
    %cst_113 = arith.constant 1.000000e+00 : f32
    %328 = vector.broadcast %cst_113 : f32 to vector<2x32xf32>
    %329 = arith.addf %328, %327 : vector<2x32xf32>
    %330 = arith.divf %328, %329 : vector<2x32xf32>
    %331 = vector.extract_strided_slice %324 {offsets = [0, 32], sizes = [2, 32], strides = [1, 1]} : vector<2x128xf32> to vector<2x32xf32>
    %332 = arith.negf %331 : vector<2x32xf32>
    %333 = math.exp %332 : vector<2x32xf32>
    %cst_114 = arith.constant 1.000000e+00 : f32
    %334 = vector.broadcast %cst_114 : f32 to vector<2x32xf32>
    %335 = arith.addf %334, %333 : vector<2x32xf32>
    %336 = arith.divf %334, %335 : vector<2x32xf32>
    %337 = vector.extract_strided_slice %324 {offsets = [0, 64], sizes = [2, 32], strides = [1, 1]} : vector<2x128xf32> to vector<2x32xf32>
    %338 = math.tanh %337 : vector<2x32xf32>
    %339 = vector.extract_strided_slice %324 {offsets = [0, 96], sizes = [2, 32], strides = [1, 1]} : vector<2x128xf32> to vector<2x32xf32>
    %340 = arith.negf %339 : vector<2x32xf32>
    %341 = math.exp %340 : vector<2x32xf32>
    %cst_115 = arith.constant 1.000000e+00 : f32
    %342 = vector.broadcast %cst_115 : f32 to vector<2x32xf32>
    %343 = arith.addf %342, %341 : vector<2x32xf32>
    %344 = arith.divf %342, %343 : vector<2x32xf32>
    %345 = arith.mulf %336, %319 : vector<2x32xf32>
    %346 = arith.mulf %330, %338 : vector<2x32xf32>
    %347 = arith.addf %345, %346 : vector<2x32xf32>
    %348 = math.tanh %347 : vector<2x32xf32>
    %349 = arith.mulf %344, %348 : vector<2x32xf32>
    %c6_116 = arith.constant 6 : index
    %c0_117 = arith.constant 0 : index
    %350 = vector.load %arg16[%c6_116, %c0_117] : memref<16x128xf32, #tpu.memory_space<vmem>>, vector<2x128xf32>
    %cst_118 = arith.constant dense<0.000000e+00> : vector<2x128xf32>
    %351 = tpu.matmul %349, %261, %cst_118 {dimension_numbers = #tpu.dot_dimension_numbers<[1], [0], [0], [1], [0, 0, 1, 1], [], []>} : vector<2x32xf32>, vector<32x128xf32>, vector<2x128xf32> -> vector<2x128xf32>
    %352 = arith.addf %350, %351 : vector<2x128xf32>
    %353 = vector.extract_strided_slice %352 {offsets = [0, 0], sizes = [2, 32], strides = [1, 1]} : vector<2x128xf32> to vector<2x32xf32>
    %354 = arith.negf %353 : vector<2x32xf32>
    %355 = math.exp %354 : vector<2x32xf32>
    %cst_119 = arith.constant 1.000000e+00 : f32
    %356 = vector.broadcast %cst_119 : f32 to vector<2x32xf32>
    %357 = arith.addf %356, %355 : vector<2x32xf32>
    %358 = arith.divf %356, %357 : vector<2x32xf32>
    %359 = vector.extract_strided_slice %352 {offsets = [0, 32], sizes = [2, 32], strides = [1, 1]} : vector<2x128xf32> to vector<2x32xf32>
    %360 = arith.negf %359 : vector<2x32xf32>
    %361 = math.exp %360 : vector<2x32xf32>
    %cst_120 = arith.constant 1.000000e+00 : f32
    %362 = vector.broadcast %cst_120 : f32 to vector<2x32xf32>
    %363 = arith.addf %362, %361 : vector<2x32xf32>
    %364 = arith.divf %362, %363 : vector<2x32xf32>
    %365 = vector.extract_strided_slice %352 {offsets = [0, 64], sizes = [2, 32], strides = [1, 1]} : vector<2x128xf32> to vector<2x32xf32>
    %366 = math.tanh %365 : vector<2x32xf32>
    %367 = vector.extract_strided_slice %352 {offsets = [0, 96], sizes = [2, 32], strides = [1, 1]} : vector<2x128xf32> to vector<2x32xf32>
    %368 = arith.negf %367 : vector<2x32xf32>
    %369 = math.exp %368 : vector<2x32xf32>
    %cst_121 = arith.constant 1.000000e+00 : f32
    %370 = vector.broadcast %cst_121 : f32 to vector<2x32xf32>
    %371 = arith.addf %370, %369 : vector<2x32xf32>
    %372 = arith.divf %370, %371 : vector<2x32xf32>
    %373 = arith.mulf %364, %347 : vector<2x32xf32>
    %374 = arith.mulf %358, %366 : vector<2x32xf32>
    %375 = arith.addf %373, %374 : vector<2x32xf32>
    %376 = math.tanh %375 : vector<2x32xf32>
    %377 = arith.mulf %372, %376 : vector<2x32xf32>
    %c8_122 = arith.constant 8 : index
    %c0_123 = arith.constant 0 : index
    %378 = vector.load %arg16[%c8_122, %c0_123] : memref<16x128xf32, #tpu.memory_space<vmem>>, vector<2x128xf32>
    %cst_124 = arith.constant dense<0.000000e+00> : vector<2x128xf32>
    %379 = tpu.matmul %377, %261, %cst_124 {dimension_numbers = #tpu.dot_dimension_numbers<[1], [0], [0], [1], [0, 0, 1, 1], [], []>} : vector<2x32xf32>, vector<32x128xf32>, vector<2x128xf32> -> vector<2x128xf32>
    %380 = arith.addf %378, %379 : vector<2x128xf32>
    %381 = vector.extract_strided_slice %380 {offsets = [0, 0], sizes = [2, 32], strides = [1, 1]} : vector<2x128xf32> to vector<2x32xf32>
    %382 = arith.negf %381 : vector<2x32xf32>
    %383 = math.exp %382 : vector<2x32xf32>
    %cst_125 = arith.constant 1.000000e+00 : f32
    %384 = vector.broadcast %cst_125 : f32 to vector<2x32xf32>
    %385 = arith.addf %384, %383 : vector<2x32xf32>
    %386 = arith.divf %384, %385 : vector<2x32xf32>
    %387 = vector.extract_strided_slice %380 {offsets = [0, 32], sizes = [2, 32], strides = [1, 1]} : vector<2x128xf32> to vector<2x32xf32>
    %388 = arith.negf %387 : vector<2x32xf32>
    %389 = math.exp %388 : vector<2x32xf32>
    %cst_126 = arith.constant 1.000000e+00 : f32
    %390 = vector.broadcast %cst_126 : f32 to vector<2x32xf32>
    %391 = arith.addf %390, %389 : vector<2x32xf32>
    %392 = arith.divf %390, %391 : vector<2x32xf32>
    %393 = vector.extract_strided_slice %380 {offsets = [0, 64], sizes = [2, 32], strides = [1, 1]} : vector<2x128xf32> to vector<2x32xf32>
    %394 = math.tanh %393 : vector<2x32xf32>
    %395 = vector.extract_strided_slice %380 {offsets = [0, 96], sizes = [2, 32], strides = [1, 1]} : vector<2x128xf32> to vector<2x32xf32>
    %396 = arith.negf %395 : vector<2x32xf32>
    %397 = math.exp %396 : vector<2x32xf32>
    %cst_127 = arith.constant 1.000000e+00 : f32
    %398 = vector.broadcast %cst_127 : f32 to vector<2x32xf32>
    %399 = arith.addf %398, %397 : vector<2x32xf32>
    %400 = arith.divf %398, %399 : vector<2x32xf32>
    %401 = arith.mulf %392, %375 : vector<2x32xf32>
    %402 = arith.mulf %386, %394 : vector<2x32xf32>
    %403 = arith.addf %401, %402 : vector<2x32xf32>
    %404 = math.tanh %403 : vector<2x32xf32>
    %405 = arith.mulf %400, %404 : vector<2x32xf32>
    %c10_128 = arith.constant 10 : index
    %c0_129 = arith.constant 0 : index
    %406 = vector.load %arg16[%c10_128, %c0_129] : memref<16x128xf32, #tpu.memory_space<vmem>>, vector<2x128xf32>
    %cst_130 = arith.constant dense<0.000000e+00> : vector<2x128xf32>
    %407 = tpu.matmul %405, %261, %cst_130 {dimension_numbers = #tpu.dot_dimension_numbers<[1], [0], [0], [1], [0, 0, 1, 1], [], []>} : vector<2x32xf32>, vector<32x128xf32>, vector<2x128xf32> -> vector<2x128xf32>
    %408 = arith.addf %406, %407 : vector<2x128xf32>
    %409 = vector.extract_strided_slice %408 {offsets = [0, 0], sizes = [2, 32], strides = [1, 1]} : vector<2x128xf32> to vector<2x32xf32>
    %410 = arith.negf %409 : vector<2x32xf32>
    %411 = math.exp %410 : vector<2x32xf32>
    %cst_131 = arith.constant 1.000000e+00 : f32
    %412 = vector.broadcast %cst_131 : f32 to vector<2x32xf32>
    %413 = arith.addf %412, %411 : vector<2x32xf32>
    %414 = arith.divf %412, %413 : vector<2x32xf32>
    %415 = vector.extract_strided_slice %408 {offsets = [0, 32], sizes = [2, 32], strides = [1, 1]} : vector<2x128xf32> to vector<2x32xf32>
    %416 = arith.negf %415 : vector<2x32xf32>
    %417 = math.exp %416 : vector<2x32xf32>
    %cst_132 = arith.constant 1.000000e+00 : f32
    %418 = vector.broadcast %cst_132 : f32 to vector<2x32xf32>
    %419 = arith.addf %418, %417 : vector<2x32xf32>
    %420 = arith.divf %418, %419 : vector<2x32xf32>
    %421 = vector.extract_strided_slice %408 {offsets = [0, 64], sizes = [2, 32], strides = [1, 1]} : vector<2x128xf32> to vector<2x32xf32>
    %422 = math.tanh %421 : vector<2x32xf32>
    %423 = vector.extract_strided_slice %408 {offsets = [0, 96], sizes = [2, 32], strides = [1, 1]} : vector<2x128xf32> to vector<2x32xf32>
    %424 = arith.negf %423 : vector<2x32xf32>
    %425 = math.exp %424 : vector<2x32xf32>
    %cst_133 = arith.constant 1.000000e+00 : f32
    %426 = vector.broadcast %cst_133 : f32 to vector<2x32xf32>
    %427 = arith.addf %426, %425 : vector<2x32xf32>
    %428 = arith.divf %426, %427 : vector<2x32xf32>
    %429 = arith.mulf %420, %403 : vector<2x32xf32>
    %430 = arith.mulf %414, %422 : vector<2x32xf32>
    %431 = arith.addf %429, %430 : vector<2x32xf32>
    %432 = math.tanh %431 : vector<2x32xf32>
    %433 = arith.mulf %428, %432 : vector<2x32xf32>
    %c12_134 = arith.constant 12 : index
    %c0_135 = arith.constant 0 : index
    %434 = vector.load %arg16[%c12_134, %c0_135] : memref<16x128xf32, #tpu.memory_space<vmem>>, vector<2x128xf32>
    %cst_136 = arith.constant dense<0.000000e+00> : vector<2x128xf32>
    %435 = tpu.matmul %433, %261, %cst_136 {dimension_numbers = #tpu.dot_dimension_numbers<[1], [0], [0], [1], [0, 0, 1, 1], [], []>} : vector<2x32xf32>, vector<32x128xf32>, vector<2x128xf32> -> vector<2x128xf32>
    %436 = arith.addf %434, %435 : vector<2x128xf32>
    %437 = vector.extract_strided_slice %436 {offsets = [0, 0], sizes = [2, 32], strides = [1, 1]} : vector<2x128xf32> to vector<2x32xf32>
    %438 = arith.negf %437 : vector<2x32xf32>
    %439 = math.exp %438 : vector<2x32xf32>
    %cst_137 = arith.constant 1.000000e+00 : f32
    %440 = vector.broadcast %cst_137 : f32 to vector<2x32xf32>
    %441 = arith.addf %440, %439 : vector<2x32xf32>
    %442 = arith.divf %440, %441 : vector<2x32xf32>
    %443 = vector.extract_strided_slice %436 {offsets = [0, 32], sizes = [2, 32], strides = [1, 1]} : vector<2x128xf32> to vector<2x32xf32>
    %444 = arith.negf %443 : vector<2x32xf32>
    %445 = math.exp %444 : vector<2x32xf32>
    %cst_138 = arith.constant 1.000000e+00 : f32
    %446 = vector.broadcast %cst_138 : f32 to vector<2x32xf32>
    %447 = arith.addf %446, %445 : vector<2x32xf32>
    %448 = arith.divf %446, %447 : vector<2x32xf32>
    %449 = vector.extract_strided_slice %436 {offsets = [0, 64], sizes = [2, 32], strides = [1, 1]} : vector<2x128xf32> to vector<2x32xf32>
    %450 = math.tanh %449 : vector<2x32xf32>
    %451 = vector.extract_strided_slice %436 {offsets = [0, 96], sizes = [2, 32], strides = [1, 1]} : vector<2x128xf32> to vector<2x32xf32>
    %452 = arith.negf %451 : vector<2x32xf32>
    %453 = math.exp %452 : vector<2x32xf32>
    %cst_139 = arith.constant 1.000000e+00 : f32
    %454 = vector.broadcast %cst_139 : f32 to vector<2x32xf32>
    %455 = arith.addf %454, %453 : vector<2x32xf32>
    %456 = arith.divf %454, %455 : vector<2x32xf32>
    %457 = arith.mulf %448, %431 : vector<2x32xf32>
    %458 = arith.mulf %442, %450 : vector<2x32xf32>
    %459 = arith.addf %457, %458 : vector<2x32xf32>
    %460 = math.tanh %459 : vector<2x32xf32>
    %461 = arith.mulf %456, %460 : vector<2x32xf32>
    %c14_140 = arith.constant 14 : index
    %c0_141 = arith.constant 0 : index
    %462 = vector.load %arg16[%c14_140, %c0_141] : memref<16x128xf32, #tpu.memory_space<vmem>>, vector<2x128xf32>
    %cst_142 = arith.constant dense<0.000000e+00> : vector<2x128xf32>
    %463 = tpu.matmul %461, %261, %cst_142 {dimension_numbers = #tpu.dot_dimension_numbers<[1], [0], [0], [1], [0, 0, 1, 1], [], []>} : vector<2x32xf32>, vector<32x128xf32>, vector<2x128xf32> -> vector<2x128xf32>
    %464 = arith.addf %462, %463 : vector<2x128xf32>
    %465 = vector.extract_strided_slice %464 {offsets = [0, 0], sizes = [2, 32], strides = [1, 1]} : vector<2x128xf32> to vector<2x32xf32>
    %466 = arith.negf %465 : vector<2x32xf32>
    %467 = math.exp %466 : vector<2x32xf32>
    %cst_143 = arith.constant 1.000000e+00 : f32
    %468 = vector.broadcast %cst_143 : f32 to vector<2x32xf32>
    %469 = arith.addf %468, %467 : vector<2x32xf32>
    %470 = arith.divf %468, %469 : vector<2x32xf32>
    %471 = vector.extract_strided_slice %464 {offsets = [0, 32], sizes = [2, 32], strides = [1, 1]} : vector<2x128xf32> to vector<2x32xf32>
    %472 = arith.negf %471 : vector<2x32xf32>
    %473 = math.exp %472 : vector<2x32xf32>
    %cst_144 = arith.constant 1.000000e+00 : f32
    %474 = vector.broadcast %cst_144 : f32 to vector<2x32xf32>
    %475 = arith.addf %474, %473 : vector<2x32xf32>
    %476 = arith.divf %474, %475 : vector<2x32xf32>
    %477 = vector.extract_strided_slice %464 {offsets = [0, 64], sizes = [2, 32], strides = [1, 1]} : vector<2x128xf32> to vector<2x32xf32>
    %478 = math.tanh %477 : vector<2x32xf32>
    %479 = vector.extract_strided_slice %464 {offsets = [0, 96], sizes = [2, 32], strides = [1, 1]} : vector<2x128xf32> to vector<2x32xf32>
    %480 = arith.negf %479 : vector<2x32xf32>
    %481 = math.exp %480 : vector<2x32xf32>
    %cst_145 = arith.constant 1.000000e+00 : f32
    %482 = vector.broadcast %cst_145 : f32 to vector<2x32xf32>
    %483 = arith.addf %482, %481 : vector<2x32xf32>
    %484 = arith.divf %482, %483 : vector<2x32xf32>
    %485 = arith.mulf %476, %459 : vector<2x32xf32>
    %486 = arith.mulf %470, %478 : vector<2x32xf32>
    %487 = arith.addf %485, %486 : vector<2x32xf32>
    %488 = math.tanh %487 : vector<2x32xf32>
    %489 = arith.mulf %484, %488 : vector<2x32xf32>
    %c1_146 = arith.constant 1 : index
    %c0_147 = arith.constant 0 : index
    %c0_148 = arith.constant 0 : index
    %490 = vector.load %arg13[%c1_146, %c0_147, %c0_148] : memref<2x2x32xf32, #tpu.memory_space<vmem>>, vector<1x2x32xf32>
    %491 = vector.shape_cast %490 : vector<1x2x32xf32> to vector<2x32xf32>
    %492 = vector.shape_cast %489 : vector<2x32xf32> to vector<1x2x32xf32>
    tpu.vector_store %arg13[%c1_146, %c0_147, %c0_148], %492 {strides = array<i32>} : memref<2x2x32xf32, #tpu.memory_space<vmem>>, vector<1x2x32xf32>,
    %c1_149 = arith.constant 1 : index
    %c0_150 = arith.constant 0 : index
    %c0_151 = arith.constant 0 : index
    %493 = vector.load %arg14[%c1_149, %c0_150, %c0_151] : memref<2x2x32xf32, #tpu.memory_space<vmem>>, vector<1x2x32xf32>
    %494 = vector.shape_cast %493 : vector<1x2x32xf32> to vector<2x32xf32>
    %495 = vector.shape_cast %487 : vector<2x32xf32> to vector<1x2x32xf32>
    tpu.vector_store %arg14[%c1_149, %c0_150, %c0_151], %495 {strides = array<i32>} : memref<2x2x32xf32, #tpu.memory_space<vmem>>, vector<1x2x32xf32>,
    %c0_152 = arith.constant 0 : index
    %c0_153 = arith.constant 0 : index
    %496 = vector.load %arg8[%c0_152, %c0_153] : memref<32x64xf32, #tpu.memory_space<vmem>>, vector<32x64xf32>
    %cst_154 = arith.constant dense<0.000000e+00> : vector<2x64xf32>
    %497 = tpu.matmul %489, %496, %cst_154 {dimension_numbers = #tpu.dot_dimension_numbers<[1], [0], [0], [1], [0, 0, 1, 1], [], []>} : vector<2x32xf32>, vector<32x64xf32>, vector<2x64xf32> -> vector<2x64xf32>
    %c0_155 = arith.constant 0 : index
    %c0_156 = arith.constant 0 : index
    %498 = vector.load %arg9[%c0_155, %c0_156] : memref<1x64xf32, #tpu.memory_space<vmem>>, vector<1x64xf32>
    %499 = vector.broadcast %498 : vector<1x64xf32> to vector<2x64xf32>
    %500 = arith.addf %497, %499 : vector<2x64xf32>
    %c0_157 = arith.constant 0 : index
    %c0_158 = arith.constant 0 : index
    %501 = vector.load %arg10[%c0_157, %c0_158] : memref<64x5xf32, #tpu.memory_space<vmem>>, vector<64x5xf32>
    %cst_159 = arith.constant dense<0.000000e+00> : vector<2x5xf32>
    %502 = tpu.matmul %500, %501, %cst_159 {dimension_numbers = #tpu.dot_dimension_numbers<[1], [0], [0], [1], [0, 0, 1, 1], [], []>} : vector<2x64xf32>, vector<64x5xf32>, vector<2x5xf32> -> vector<2x5xf32>
    %c0_160 = arith.constant 0 : index
    %c0_161 = arith.constant 0 : index
    %503 = vector.load %arg11[%c0_160, %c0_161] : memref<1x5xf32, #tpu.memory_space<vmem>>, vector<1x5xf32>
    %504 = vector.broadcast %503 : vector<1x5xf32> to vector<2x5xf32>
    %505 = arith.addf %502, %504 : vector<2x5xf32>
    %c0_162 = arith.constant 0 : index
    %c0_163 = arith.constant 0 : index
    %506 = vector.load %arg12[%c0_162, %c0_163] : memref<2x5xf32, #tpu.memory_space<vmem>>, vector<2x5xf32>
    tpu.vector_store %arg12[%c0_162, %c0_163], %505 {strides = array<i32>} : memref<2x5xf32, #tpu.memory_space<vmem>>, vector<2x5xf32>,
    return
  }
}

</mosaic_0001>

<llo_original>
// kernel: tpu_custom_call.1
$region0: #{tpu_custom_call.1}
  #allocation0 [shape = 'u32[]', space=smem, size = 0x4, offset = 0x4, fixed_abs, tag = 'smem constant byte address 0x4 - core index']
  #allocation1 [shape = 'u32[144,128]{1,0:T(1,128)}', space=vmem, size = 0x12000, scoped, tag = 'internal scratch']
  #allocation2 [shape = 'f32[16,32]{1,0:T(8,128)}', space=vmem, size = 0x2000, scoped, tag = 'scratch operand']
  #allocation3 [shape = 'f32[16,128]{1,0:T(8,128)}', space=vmem, size = 0x2000, scoped, tag = 'scratch operand']
  %s0 = inlined_call_operand.vmem [shape: f32[16,4], index: 0, kind: input, shape index: {}]
  %s1 = inlined_call_operand.vmem [shape: f32[2,2,32], index: 1, kind: input, shape index: {}]
  %s2 = inlined_call_operand.vmem [shape: f32[2,2,32], index: 2, kind: input, shape index: {}]
  %s3 = inlined_call_operand.hbm [shape: f32[4,128], index: 3, kind: input, shape index: {}]
  %s4 = inlined_call_operand.vmem [shape: f32[1,128], index: 4, kind: input, shape index: {}]
  %s5 = inlined_call_operand.vmem [shape: f32[2,32,128], index: 5, kind: input, shape index: {}]
  %s6 = inlined_call_operand.vmem [shape: f32[1,32,128], index: 6, kind: input, shape index: {}]
  %s7 = inlined_call_operand.vmem [shape: f32[1,1,128], index: 7, kind: input, shape index: {}]
  %s8 = inlined_call_operand.hbm [shape: f32[32,64], index: 8, kind: input, shape index: {}]
  %s9 = inlined_call_operand.vmem [shape: f32[1,64], index: 9, kind: input, shape index: {}]
  %s10 = inlined_call_operand.vmem [shape: f32[64,5], index: 10, kind: input, shape index: {}]
  %s11 = inlined_call_operand.vmem [shape: f32[1,5], index: 11, kind: input, shape index: {}]
  %s12 = inlined_call_operand.hbm [shape: f32[2,5], index: 12, kind: output, shape index: {0}]
  %s13 = inlined_call_operand.hbm [shape: f32[2,2,32], index: 13, kind: output, shape index: {1}]
  %s14 = inlined_call_operand.hbm [shape: f32[2,2,32], index: 14, kind: output, shape index: {2}]
  %15 = xla_tuple %s12, %s13, %s14
  %s16 = sld [smem:[#allocation0]]
  $region82: #{tpu_custom_call.1} parent=0
    _
  %s18 = ssub.s32 1, %s16
  %s19 = scalar_select 0, %s18, %s16
  $region1: #{tpu_custom_call.1} parent=0
    #allocation4 [shape = 'u8[2048]{0}', space=vmem, size = 0x800, scoped, tag = 'input window, operand 3, single buffered']
    #allocation5 [shape = 's32[1]{0}', space=sflag, size = 0x4, scoped, tag = 'scoped memory for tpu_custom_call.1']
    #allocation6 [shape = 's32[1]{0}', space=sflag, size = 0x4, scoped, tag = 'scoped memory for tpu_custom_call.1']
    #allocation7 [shape = 'u8[16384]{0}', space=vmem, size = 0x4000, scoped, tag = 'input window, operand 8, single buffered']
    #allocation8 [shape = 's32[1]{0}', space=sflag, size = 0x4, scoped, tag = 'scoped memory for tpu_custom_call.1']
    #allocation9 [shape = 'u8[1024]{0}', space=vmem, size = 0x400, scoped, tag = 'output window, operand 0, single buffered']
    #allocation10 [shape = 'u8[2048]{0}', space=vmem, size = 0x800, scoped, tag = 'output window, operand 1, single buffered']
    #allocation11 [shape = 's32[1]{0}', space=sflag, size = 0x4, scoped, tag = 'scoped memory for tpu_custom_call.1']
    #allocation12 [shape = 'u8[2048]{0}', space=vmem, size = 0x800, scoped, tag = 'output window, operand 2, single buffered']
    %20 = vsyncpa [#allocation5], 0
    %21 = vsyncpa [#allocation8], 0
    %22 = vsyncpa [#allocation6], 0
    %23 = vsyncpa [#allocation11], 0
    // Predicated region
    $region2: #{tpu_custom_call.1} parent=1 // pred_check
      _
    $region3: #{tpu_custom_call.1} parent=1 // pred_check_branch
      %25 = sbr.rel (0) target = $region5
    $region4: #{tpu_custom_call.1} parent=1 // pred_region
      _
    $region5: #{tpu_custom_call.1} parent=1 // pred_fallthru
      _
    // Predicated region
    $region6: #{tpu_custom_call.1} parent=1 // pred_check
      _
    $region7: #{tpu_custom_call.1} parent=1 // pred_check_branch
      %27 = sbr.rel (0) target = $region9
    $region8: #{tpu_custom_call.1} parent=1 // pred_region
      _
    $region9: #{tpu_custom_call.1} parent=1 // pred_fallthru
      _
    // Predicated region
    $region10: #{tpu_custom_call.1} parent=1 // pred_check
      _
    $region11: #{tpu_custom_call.1} parent=1 // pred_check_branch
      %29 = sbr.rel (0) target = $region13
    $region12: #{tpu_custom_call.1} parent=1 // pred_region
      _
    $region13: #{tpu_custom_call.1} parent=1 // pred_fallthru
      _
    // Predicated region
    $region14: #{tpu_custom_call.1} parent=1 // pred_check
      _
    $region15: #{tpu_custom_call.1} parent=1 // pred_check_branch
      %31 = sbr.rel (0) target = $region17
    $region16: #{tpu_custom_call.1} parent=1 // pred_region
      %s33 = ssub.s32 64, 64
      %34 = vsyncadd [#allocation5], %s33
      %s36 = sshll.u32 [#allocation4], 4
      %s37 = int_to_ptr.vmem [resolvable:$true] %s36
      %39 = dma.hbm_to_vmem [thread:$0]  %s3, 64, %s37, [#allocation5]
    $region17: #{tpu_custom_call.1} parent=1 // pred_fallthru
      _
    // Predicated region
    $region18: #{tpu_custom_call.1} parent=1 // pred_check
      _
    $region19: #{tpu_custom_call.1} parent=1 // pred_check_branch
      %41 = sbr.rel (0) target = $region21
    $region20: #{tpu_custom_call.1} parent=1 // pred_region
      _
    $region21: #{tpu_custom_call.1} parent=1 // pred_fallthru
      _
    // Predicated region
    $region22: #{tpu_custom_call.1} parent=1 // pred_check
      _
    $region23: #{tpu_custom_call.1} parent=1 // pred_check_branch
      %43 = sbr.rel (0) target = $region25
    $region24: #{tpu_custom_call.1} parent=1 // pred_region
      _
    $region25: #{tpu_custom_call.1} parent=1 // pred_fallthru
      _
    // Predicated region
    $region26: #{tpu_custom_call.1} parent=1 // pred_check
      _
    $region27: #{tpu_custom_call.1} parent=1 // pred_check_branch
      %45 = sbr.rel (0) target = $region29
    $region28: #{tpu_custom_call.1} parent=1 // pred_region
      _
    $region29: #{tpu_custom_call.1} parent=1 // pred_fallthru
      _
    // Predicated region
    $region30: #{tpu_custom_call.1} parent=1 // pred_check
      _
    $region31: #{tpu_custom_call.1} parent=1 // pred_check_branch
      %47 = sbr.rel (0) target = $region33
    $region32: #{tpu_custom_call.1} parent=1 // pred_region
      _
    $region33: #{tpu_custom_call.1} parent=1 // pred_fallthru
      _
    // Predicated region
    $region34: #{tpu_custom_call.1} parent=1 // pred_check
      _
    $region35: #{tpu_custom_call.1} parent=1 // pred_check_branch
      %49 = sbr.rel (0) target = $region37
    $region36: #{tpu_custom_call.1} parent=1 // pred_region
      %s51 = ssub.s32 512, 512
      %52 = vsyncadd [#allocation8], %s51
      %s53 = sshll.u32 [#allocation7], 4
      %s54 = int_to_ptr.vmem [resolvable:$true] %s53
      %59 = dma.hbm_to_vmem [thread:$0]  %s8, 512, %s54, [#allocation8], 128, 128, 8
    $region37: #{tpu_custom_call.1} parent=1 // pred_fallthru
      _
    // Predicated region
    $region38: #{tpu_custom_call.1} parent=1 // pred_check
      _
    $region39: #{tpu_custom_call.1} parent=1 // pred_check_branch
      %61 = sbr.rel (0) target = $region41
    $region40: #{tpu_custom_call.1} parent=1 // pred_region
      _
    $region41: #{tpu_custom_call.1} parent=1 // pred_fallthru
      _
    // Predicated region
    $region42: #{tpu_custom_call.1} parent=1 // pred_check
      _
    $region43: #{tpu_custom_call.1} parent=1 // pred_check_branch
      %63 = sbr.rel (0) target = $region45
    $region44: #{tpu_custom_call.1} parent=1 // pred_region
      _
    $region45: #{tpu_custom_call.1} parent=1 // pred_fallthru
      _
    // Predicated region
    $region46: #{tpu_custom_call.1} parent=1 // pred_check
      _
    $region47: #{tpu_custom_call.1} parent=1 // pred_check_branch
      %65 = sbr.rel (0) target = $region49
    $region48: #{tpu_custom_call.1} parent=1 // pred_region
      _
    $region49: #{tpu_custom_call.1} parent=1 // pred_fallthru
      _
    // Predicated region
    $region50: #{tpu_custom_call.1} parent=1 // pred_check
      _
    $region51: #{tpu_custom_call.1} parent=1 // pred_check_branch
      %67 = sbr.rel (0) target = $region53
    $region52: #{tpu_custom_call.1} parent=1 // pred_region
      %68 = dma.done [#allocation5], 64
    $region53: #{tpu_custom_call.1} parent=1 // pred_fallthru
      _
    // Predicated region
    $region54: #{tpu_custom_call.1} parent=1 // pred_check
      _
    $region55: #{tpu_custom_call.1} parent=1 // pred_check_branch
      %70 = sbr.rel (0) target = $region57
    $region56: #{tpu_custom_call.1} parent=1 // pred_region
      %71 = dma.done [#allocation8], 512
    $region57: #{tpu_custom_call.1} parent=1 // pred_fallthru
      _
    %v72 = vld [vmem:[%s0] sm:$0xff]
    %v73 = vld [vmem:[%s0 + $0x8] sm:$0xff]
    %v74 = vld [vmem:[#allocation4] sm:$0xf]
    %v75 = vld [vmem:[%s4] sm:$0x1]
    %v77 = vlaneseq
    %v78 = vshrl.u32 %v77, 7
    %v79 = vsub.s32 0, %v78
    %v80 = vrot.slane %v75, %v79
    %vm82 = vcmask 31744
    %v84 = vsel %vm82, %v72, 0
    %v87 = vsel %vm82, %v73, 0
    %vm89 = vcmask 1043456
    %v91 = vsel %vm89, %v74, 0
    %93 = vmatprep.subr.mxu0 0.0
    %94 = vmatpush1.msra.mxu0 %v91
    %95 = vmatprep.subr.mxu0 0.0
    %96 = vmatpush1.msra.mxu0 0.0
    %97 = vmatprep.subr.mxu0 0.0
    %98 = vmatpush1.msra.mxu0 0.0
    %99 = vmatprep.subr.mxu0 0.0
    %100 = vmatpush1.msra.mxu0 0.0
    %101 = vmatprep.subr.mxu0 0.0
    %102 = vmatpush1.msra.mxu0 0.0
    %103 = vmatprep.subr.mxu0 0.0
    %104 = vmatpush1.msra.mxu0 0.0
    %105 = vmatprep.subr.mxu0 0.0
    %106 = vmatpush1.msra.mxu0 0.0
    %107 = vmatprep.subr.mxu0 0.0
    %108 = vmatpush1.msra.mxu0 0.0
    %109 = vmatprep.subr.mxu0 0.0
    %110 = vmatpush1.msra.mxu0 0.0
    %111 = vmatprep.subr.mxu0 0.0
    %112 = vmatpush1.msra.mxu0 0.0
    %113 = vmatprep.subr.mxu0 0.0
    %114 = vmatpush1.msra.mxu0 0.0
    %115 = vmatprep.subr.mxu0 0.0
    %116 = vmatpush1.msra.mxu0 0.0
    %117 = vmatprep.subr.mxu0 0.0
    %118 = vmatpush1.msra.mxu0 0.0
    %119 = vmatprep.subr.mxu0 0.0
    %120 = vmatpush1.msra.mxu0 0.0
    %121 = vmatprep.subr.mxu0 0.0
    %122 = vmatpush1.msra.mxu0 0.0
    %123 = vmatprep.subr.mxu0 0.0
    %124 = vmatpush1.msra.mxu0 0.0
    %125 = vmatprep.subr.mxu0 0.0
    %126 = vmatpush1.msra.mxu0 0.0
    %127 = vmatprep.subr.mxu0 0.0
    %128 = vmatpush1.msra.mxu0 0.0
    %129 = vmatprep.subr.mxu0 0.0
    %130 = vmatpush1.msra.mxu0 0.0
    %131 = vmatprep.subr.mxu0 0.0
    %132 = vmatpush1.msra.mxu0 0.0
    %133 = vmatprep.subr.mxu0 0.0
    %134 = vmatpush1.msra.mxu0 0.0
    %135 = vmatprep.subr.mxu0 0.0
    %136 = vmatpush1.msra.mxu0 0.0
    %137 = vmatprep.subr.mxu0 0.0
    %138 = vmatpush1.msra.mxu0 0.0
    %139 = vmatprep.subr.mxu0 0.0
    %140 = vmatpush1.msra.mxu0 0.0
    %141 = vmatprep.subr.mxu0 0.0
    %142 = vmatpush1.msra.mxu0 0.0
    %143 = vmatprep.subr.mxu0 0.0
    %144 = vmatpush1.msra.mxu0 0.0
    %145 = vmatprep.subr.mxu0 0.0
    %146 = vmatpush1.msra.mxu0 0.0
    %147 = vmatprep.subr.mxu0 0.0
    %148 = vmatpush1.msra.mxu0 0.0
    %149 = vmatprep.subr.mxu0 0.0
    %150 = vmatpush1.msra.mxu0 0.0
    %151 = vmatprep.subr.mxu0 0.0
    %152 = vmatpush1.msra.mxu0 0.0
    %153 = vmatprep.subr.mxu0 0.0
    %154 = vmatpush1.msra.mxu0 0.0
    %155 = vmatprep.subr.mxu0 0.0
    %156 = vmatpush1.msra.mxu0 0.0
    %157 = vmatprep.mubr.f32.mxu0 0.0
    %158 = vmatmul.mubr.f32.gmra.mrb[0].mxu0 %v84
    %v159 = vpop.f32.mrb[0].mxu0
    %v160 = vadd.f32 %v80, %v159
    %v161 = vpop.f32.mrb[0].mxu0
    %162 = vmatprep.mubr.f32.mxu0 0.0
    %163 = vmatmul.mubr.f32.gmra.mrb[0].mxu0 %v87
    %v164 = vpop.f32.mrb[0].mxu0
    %v165 = vadd.f32 %v80, %v164
    %v166 = vpop.f32.mrb[0].mxu0
    %167 = vdwg.mxu0
    %168 = vst [vmem:[#allocation3] sm:$0xff] %v160
    %169 = vst [vmem:[#allocation3 + $0x8] sm:$0xff] %v165
    %v170 = vld [vmem:[%s5] sm:$0xff]
    %v171 = vld [vmem:[%s5 + $0x8] sm:$0xff]
    %v172 = vld [vmem:[%s5 + $0x10] sm:$0xff]
    %v173 = vld [vmem:[%s5 + $0x18] sm:$0xff]
    %v174 = vld [vmem:[%s1] sm:$0x3]
    %v175 = vld [vmem:[%s2] sm:$0x3]
    %v176 = vld [vmem:[#allocation3] sm:$0x3]
    %vm177 = vcmask 261120
    %v179 = vsel %vm177, %v174, 0
    %181 = vmatprep.subr.mxu0 0.0
    %182 = vmatpush1.msra.mxu0 %v170
    %183 = vmatprep.subr.mxu0 0.0
    %184 = vmatpush1.msra.mxu0 %v171
    %185 = vmatprep.subr.mxu0 0.0
    %186 = vmatpush1.msra.mxu0 %v172
    %187 = vmatprep.subr.mxu0 0.0
    %188 = vmatpush1.msra.mxu0 %v173
    %189 = vmatprep.subr.mxu0 0.0
    %190 = vmatpush1.msra.mxu0 0.0
    %191 = vmatprep.subr.mxu0 0.0
    %192 = vmatpush1.msra.mxu0 0.0
    %193 = vmatprep.subr.mxu0 0.0
    %194 = vmatpush1.msra.mxu0 0.0
    %195 = vmatprep.subr.mxu0 0.0
    %196 = vmatpush1.msra.mxu0 0.0
    %197 = vmatprep.subr.mxu0 0.0
    %198 = vmatpush1.msra.mxu0 0.0
    %199 = vmatprep.subr.mxu0 0.0
    %200 = vmatpush1.msra.mxu0 0.0
    %201 = vmatprep.subr.mxu0 0.0
    %202 = vmatpush1.msra.mxu0 0.0
    %203 = vmatprep.subr.mxu0 0.0
    %204 = vmatpush1.msra.mxu0 0.0
    %205 = vmatprep.subr.mxu0 0.0
    %206 = vmatpush1.msra.mxu0 0.0
    %207 = vmatprep.subr.mxu0 0.0
    %208 = vmatpush1.msra.mxu0 0.0
    %209 = vmatprep.subr.mxu0 0.0
    %210 = vmatpush1.msra.mxu0 0.0
    %211 = vmatprep.subr.mxu0 0.0
    %212 = vmatpush1.msra.mxu0 0.0
    %213 = vmatprep.subr.mxu0 0.0
    %214 = vmatpush1.msra.mxu0 0.0
    %215 = vmatprep.subr.mxu0 0.0
    %216 = vmatpush1.msra.mxu0 0.0
    %217 = vmatprep.subr.mxu0 0.0
    %218 = vmatpush1.msra.mxu0 0.0
    %219 = vmatprep.subr.mxu0 0.0
    %220 = vmatpush1.msra.mxu0 0.0
    %221 = vmatprep.subr.mxu0 0.0
    %222 = vmatpush1.msra.mxu0 0.0
    %223 = vmatprep.subr.mxu0 0.0
    %224 = vmatpush1.msra.mxu0 0.0
    %225 = vmatprep.subr.mxu0 0.0
    %226 = vmatpush1.msra.mxu0 0.0
    %227 = vmatprep.subr.mxu0 0.0
    %228 = vmatpush1.msra.mxu0 0.0
    %229 = vmatprep.subr.mxu0 0.0
    %230 = vmatpush1.msra.mxu0 0.0
    %231 = vmatprep.subr.mxu0 0.0
    %232 = vmatpush1.msra.mxu0 0.0
    %233 = vmatprep.subr.mxu0 0.0
    %234 = vmatpush1.msra.mxu0 0.0
    %235 = vmatprep.subr.mxu0 0.0
    %236 = vmatpush1.msra.mxu0 0.0
    %237 = vmatprep.subr.mxu0 0.0
    %238 = vmatpush1.msra.mxu0 0.0
    %239 = vmatprep.subr.mxu0 0.0
    %240 = vmatpush1.msra.mxu0 0.0
    %241 = vmatprep.subr.mxu0 0.0
    %242 = vmatpush1.msra.mxu0 0.0
    %243 = vmatprep.subr.mxu0 0.0
    %244 = vmatpush1.msra.mxu0 0.0
    %245 = vmatprep.mubr.f32.mxu0 0.0
    %246 = vmatmul.mubr.f32.gmra.mrb[0].mxu0 %v179
    %v247 = vpop.f32.mrb[0].mxu0
    %v248 = vadd.f32 0.0, %v247
    %v249 = vpop.f32.mrb[0].mxu0
    %250 = vdwg.mxu0
    %v251 = vadd.f32 %v176, %v248
    %v252 = vxor.u32 %v251, 2147483648
    %v253 = vmul.f32 %v252, 1.442695
    %v254 = vpow.pop %v253
    %v255 = vadd.f32 %v254, 1.0
    %v256 = vrcp.pop %v255
    %v257 = vmul.f32 1.0, %v256
    %v258 = vtanh.pop %v251
    %260 = vrot.lane.b32.xlu0 %v175, 32
    %v261 = vpop.permute.xlu0 %260
    %v263 = vmul.f32 %v257, %v261
    %265 = vrot.lane.b32.xlu0 %v258, 64
    %v266 = vpop.permute.xlu0 %265
    %v268 = vmul.f32 %v257, %v266
    %270 = vrot.lane.b32.xlu0 %v268, 32
    %v271 = vpop.permute.xlu0 %270
    %v273 = vadd.f32 %v263, %v271
    %v274 = vtanh.pop %v273
    %276 = vrot.lane.b32.xlu0 %v274, 64
    %v277 = vpop.permute.xlu0 %276
    %v279 = vmul.f32 %v257, %v277
    %281 = vrot.lane.b32.xlu0 %v279, 32
    %v282 = vpop.permute.xlu0 %281
    %vm284 = vcmask 254976
    %285 = vst.msk [vmem:[#allocation2] sm:$0x3] %vm284, %v282
    %v286 = vld [vmem:[#allocation3 + $0x2] sm:$0x3]
    %v287 = vsel %vm177, %v282, 0
    %289 = vmatprep.subr.mxu0 0.0
    %290 = vmatpush1.msra.mxu0 %v170
    %291 = vmatprep.subr.mxu0 0.0
    %292 = vmatpush1.msra.mxu0 %v171
    %293 = vmatprep.subr.mxu0 0.0
    %294 = vmatpush1.msra.mxu0 %v172
    %295 = vmatprep.subr.mxu0 0.0
    %296 = vmatpush1.msra.mxu0 %v173
    %297 = vmatprep.subr.mxu0 0.0
    %298 = vmatpush1.msra.mxu0 0.0
    %299 = vmatprep.subr.mxu0 0.0
    %300 = vmatpush1.msra.mxu0 0.0
    %301 = vmatprep.subr.mxu0 0.0
    %302 = vmatpush1.msra.mxu0 0.0
    %303 = vmatprep.subr.mxu0 0.0
    %304 = vmatpush1.msra.mxu0 0.0
    %305 = vmatprep.subr.mxu0 0.0
    %306 = vmatpush1.msra.mxu0 0.0
    %307 = vmatprep.subr.mxu0 0.0
    %308 = vmatpush1.msra.mxu0 0.0
    %309 = vmatprep.subr.mxu0 0.0
    %310 = vmatpush1.msra.mxu0 0.0
    %311 = vmatprep.subr.mxu0 0.0
    %312 = vmatpush1.msra.mxu0 0.0
    %313 = vmatprep.subr.mxu0 0.0
    %314 = vmatpush1.msra.mxu0 0.0
    %315 = vmatprep.subr.mxu0 0.0
    %316 = vmatpush1.msra.mxu0 0.0
    %317 = vmatprep.subr.mxu0 0.0
    %318 = vmatpush1.msra.mxu0 0.0
    %319 = vmatprep.subr.mxu0 0.0
    %320 = vmatpush1.msra.mxu0 0.0
    %321 = vmatprep.subr.mxu0 0.0
    %322 = vmatpush1.msra.mxu0 0.0
    %323 = vmatprep.subr.mxu0 0.0
    %324 = vmatpush1.msra.mxu0 0.0
    %325 = vmatprep.subr.mxu0 0.0
    %326 = vmatpush1.msra.mxu0 0.0
    %327 = vmatprep.subr.mxu0 0.0
    %328 = vmatpush1.msra.mxu0 0.0
    %329 = vmatprep.subr.mxu0 0.0
    %330 = vmatpush1.msra.mxu0 0.0
    %331 = vmatprep.subr.mxu0 0.0
    %332 = vmatpush1.msra.mxu0 0.0
    %333 = vmatprep.subr.mxu0 0.0
    %334 = vmatpush1.msra.mxu0 0.0
    %335 = vmatprep.subr.mxu0 0.0
    %336 = vmatpush1.msra.mxu0 0.0
    %337 = vmatprep.subr.mxu0 0.0
    %338 = vmatpush1.msra.mxu0 0.0
    %339 = vmatprep.subr.mxu0 0.0
    %340 = vmatpush1.msra.mxu0 0.0
    %341 = vmatprep.subr.mxu0 0.0
    %342 = vmatpush1.msra.mxu0 0.0
    %343 = vmatprep.subr.mxu0 0.0
    %344 = vmatpush1.msra.mxu0 0.0
    %345 = vmatprep.subr.mxu0 0.0
    %346 = vmatpush1.msra.mxu0 0.0
    %347 = vmatprep.subr.mxu0 0.0
    %348 = vmatpush1.msra.mxu0 0.0
    %349 = vmatprep.subr.mxu0 0.0
    %350 = vmatpush1.msra.mxu0 0.0
    %351 = vmatprep.subr.mxu0 0.0
    %352 = vmatpush1.msra.mxu0 0.0
    %353 = vmatprep.mubr.f32.mxu0 0.0
    %354 = vmatmul.mubr.f32.gmra.mrb[0].mxu0 %v287
    %v355 = vpop.f32.mrb[0].mxu0
    %v356 = vadd.f32 0.0, %v355
    %v357 = vpop.f32.mrb[0].mxu0
    %358 = vdwg.mxu0
    %v359 = vadd.f32 %v286, %v356
    %v360 = vxor.u32 %v359, 2147483648
    %v361 = vmul.f32 %v360, 1.442695
    %v362 = vpow.pop %v361
    %v363 = vadd.f32 %v362, 1.0
    %v364 = vrcp.pop %v363
    %v365 = vmul.f32 1.0, %v364
    %v366 = vtanh.pop %v359
    %v367 = vmul.f32 %v365, %v273
    %369 = vrot.lane.b32.xlu0 %v366, 64
    %v370 = vpop.permute.xlu0 %369
    %v372 = vmul.f32 %v365, %v370
    %374 = vrot.lane.b32.xlu0 %v372, 32
    %v375 = vpop.permute.xlu0 %374
    %v377 = vadd.f32 %v367, %v375
    %v378 = vtanh.pop %v377
    %380 = vrot.lane.b32.xlu0 %v378, 64
    %v381 = vpop.permute.xlu0 %380
    %v383 = vmul.f32 %v365, %v381
    %385 = vrot.lane.b32.xlu0 %v383, 32
    %v386 = vpop.permute.xlu0 %385
    %388 = vst.msk [vmem:[#allocation2 + $0x2] sm:$0x3] %vm284, %v386
    %v389 = vld [vmem:[#allocation3 + $0x4] sm:$0x3]
    %v390 = vsel %vm177, %v386, 0
    %392 = vmatprep.subr.mxu0 0.0
    %393 = vmatpush1.msra.mxu0 %v170
    %394 = vmatprep.subr.mxu0 0.0
    %395 = vmatpush1.msra.mxu0 %v171
    %396 = vmatprep.subr.mxu0 0.0
    %397 = vmatpush1.msra.mxu0 %v172
    %398 = vmatprep.subr.mxu0 0.0
    %399 = vmatpush1.msra.mxu0 %v173
    %400 = vmatprep.subr.mxu0 0.0
    %401 = vmatpush1.msra.mxu0 0.0
    %402 = vmatprep.subr.mxu0 0.0
    %403 = vmatpush1.msra.mxu0 0.0
    %404 = vmatprep.subr.mxu0 0.0
    %405 = vmatpush1.msra.mxu0 0.0
    %406 = vmatprep.subr.mxu0 0.0
    %407 = vmatpush1.msra.mxu0 0.0
    %408 = vmatprep.subr.mxu0 0.0
    %409 = vmatpush1.msra.mxu0 0.0
    %410 = vmatprep.subr.mxu0 0.0
    %411 = vmatpush1.msra.mxu0 0.0
    %412 = vmatprep.subr.mxu0 0.0
    %413 = vmatpush1.msra.mxu0 0.0
    %414 = vmatprep.subr.mxu0 0.0
    %415 = vmatpush1.msra.mxu0 0.0
    %416 = vmatprep.subr.mxu0 0.0
    %417 = vmatpush1.msra.mxu0 0.0
    %418 = vmatprep.subr.mxu0 0.0
    %419 = vmatpush1.msra.mxu0 0.0
    %420 = vmatprep.subr.mxu0 0.0
    %421 = vmatpush1.msra.mxu0 0.0
    %422 = vmatprep.subr.mxu0 0.0
    %423 = vmatpush1.msra.mxu0 0.0
    %424 = vmatprep.subr.mxu0 0.0
    %425 = vmatpush1.msra.mxu0 0.0
    %426 = vmatprep.subr.mxu0 0.0
    %427 = vmatpush1.msra.mxu0 0.0
    %428 = vmatprep.subr.mxu0 0.0
    %429 = vmatpush1.msra.mxu0 0.0
    %430 = vmatprep.subr.mxu0 0.0
    %431 = vmatpush1.msra.mxu0 0.0
    %432 = vmatprep.subr.mxu0 0.0
    %433 = vmatpush1.msra.mxu0 0.0
    %434 = vmatprep.subr.mxu0 0.0
    %435 = vmatpush1.msra.mxu0 0.0
    %436 = vmatprep.subr.mxu0 0.0
    %437 = vmatpush1.msra.mxu0 0.0
    %438 = vmatprep.subr.mxu0 0.0
    %439 = vmatpush1.msra.mxu0 0.0
    %440 = vmatprep.subr.mxu0 0.0
    %441 = vmatpush1.msra.mxu0 0.0
    %442 = vmatprep.subr.mxu0 0.0
    %443 = vmatpush1.msra.mxu0 0.0
    %444 = vmatprep.subr.mxu0 0.0
    %445 = vmatpush1.msra.mxu0 0.0
    %446 = vmatprep.subr.mxu0 0.0
    %447 = vmatpush1.msra.mxu0 0.0
    %448 = vmatprep.subr.mxu0 0.0
    %449 = vmatpush1.msra.mxu0 0.0
    %450 = vmatprep.subr.mxu0 0.0
    %451 = vmatpush1.msra.mxu0 0.0
    %452 = vmatprep.subr.mxu0 0.0
    %453 = vmatpush1.msra.mxu0 0.0
    %454 = vmatprep.subr.mxu0 0.0
    %455 = vmatpush1.msra.mxu0 0.0
    %456 = vmatprep.mubr.f32.mxu0 0.0
    %457 = vmatmul.mubr.f32.gmra.mrb[0].mxu0 %v390
    %v458 = vpop.f32.mrb[0].mxu0
    %v459 = vadd.f32 0.0, %v458
    %v460 = vpop.f32.mrb[0].mxu0
    %461 = vdwg.mxu0
    %v462 = vadd.f32 %v389, %v459
    %v463 = vxor.u32 %v462, 2147483648
    %v464 = vmul.f32 %v463, 1.442695
    %v465 = vpow.pop %v464
    %v466 = vadd.f32 %v465, 1.0
    %v467 = vrcp.pop %v466
    %v468 = vmul.f32 1.0, %v467
    %v469 = vtanh.pop %v462
    %v470 = vmul.f32 %v468, %v377
    %472 = vrot.lane.b32.xlu0 %v469, 64
    %v473 = vpop.permute.xlu0 %472
    %v475 = vmul.f32 %v468, %v473
    %477 = vrot.lane.b32.xlu0 %v475, 32
    %v478 = vpop.permute.xlu0 %477
    %v480 = vadd.f32 %v470, %v478
    %v481 = vtanh.pop %v480
    %483 = vrot.lane.b32.xlu0 %v481, 64
    %v484 = vpop.permute.xlu0 %483
    %v486 = vmul.f32 %v468, %v484
    %488 = vrot.lane.b32.xlu0 %v486, 32
    %v489 = vpop.permute.xlu0 %488
    %491 = vst.msk [vmem:[#allocation2 + $0x4] sm:$0x3] %vm284, %v489
    %v492 = vld [vmem:[#allocation3 + $0x6] sm:$0x3]
    %v493 = vsel %vm177, %v489, 0
    %495 = vmatprep.subr.mxu0 0.0
    %496 = vmatpush1.msra.mxu0 %v170
    %497 = vmatprep.subr.mxu0 0.0
    %498 = vmatpush1.msra.mxu0 %v171
    %499 = vmatprep.subr.mxu0 0.0
    %500 = vmatpush1.msra.mxu0 %v172
    %501 = vmatprep.subr.mxu0 0.0
    %502 = vmatpush1.msra.mxu0 %v173
    %503 = vmatprep.subr.mxu0 0.0
    %504 = vmatpush1.msra.mxu0 0.0
    %505 = vmatprep.subr.mxu0 0.0
    %506 = vmatpush1.msra.mxu0 0.0
    %507 = vmatprep.subr.mxu0 0.0
    %508 = vmatpush1.msra.mxu0 0.0
    %509 = vmatprep.subr.mxu0 0.0
    %510 = vmatpush1.msra.mxu0 0.0
    %511 = vmatprep.subr.mxu0 0.0
    %512 = vmatpush1.msra.mxu0 0.0
    %513 = vmatprep.subr.mxu0 0.0
    %514 = vmatpush1.msra.mxu0 0.0
    %515 = vmatprep.subr.mxu0 0.0
    %516 = vmatpush1.msra.mxu0 0.0
    %517 = vmatprep.subr.mxu0 0.0
    %518 = vmatpush1.msra.mxu0 0.0
    %519 = vmatprep.subr.mxu0 0.0
    %520 = vmatpush1.msra.mxu0 0.0
    %521 = vmatprep.subr.mxu0 0.0
    %522 = vmatpush1.msra.mxu0 0.0
    %523 = vmatprep.subr.mxu0 0.0
    %524 = vmatpush1.msra.mxu0 0.0
    %525 = vmatprep.subr.mxu0 0.0
    %526 = vmatpush1.msra.mxu0 0.0
    %527 = vmatprep.subr.mxu0 0.0
    %528 = vmatpush1.msra.mxu0 0.0
    %529 = vmatprep.subr.mxu0 0.0
    %530 = vmatpush1.msra.mxu0 0.0
    %531 = vmatprep.subr.mxu0 0.0
    %532 = vmatpush1.msra.mxu0 0.0
    %533 = vmatprep.subr.mxu0 0.0
    %534 = vmatpush1.msra.mxu0 0.0
    %535 = vmatprep.subr.mxu0 0.0
    %536 = vmatpush1.msra.mxu0 0.0
    %537 = vmatprep.subr.mxu0 0.0
    %538 = vmatpush1.msra.mxu0 0.0
    %539 = vmatprep.subr.mxu0 0.0
    %540 = vmatpush1.msra.mxu0 0.0
    %541 = vmatprep.subr.mxu0 0.0
    %542 = vmatpush1.msra.mxu0 0.0
    %543 = vmatprep.subr.mxu0 0.0
    %544 = vmatpush1.msra.mxu0 0.0
    %545 = vmatprep.subr.mxu0 0.0
    %546 = vmatpush1.msra.mxu0 0.0
    %547 = vmatprep.subr.mxu0 0.0
    %548 = vmatpush1.msra.mxu0 0.0
    %549 = vmatprep.subr.mxu0 0.0
    %550 = vmatpush1.msra.mxu0 0.0
    %551 = vmatprep.subr.mxu0 0.0
    %552 = vmatpush1.msra.mxu0 0.0
    %553 = vmatprep.subr.mxu0 0.0
    %554 = vmatpush1.msra.mxu0 0.0
    %555 = vmatprep.subr.mxu0 0.0
    %556 = vmatpush1.msra.mxu0 0.0
    %557 = vmatprep.subr.mxu0 0.0
    %558 = vmatpush1.msra.mxu0 0.0
    %559 = vmatprep.mubr.f32.mxu0 0.0
    %560 = vmatmul.mubr.f32.gmra.mrb[0].mxu0 %v493
    %v561 = vpop.f32.mrb[0].mxu0
    %v562 = vadd.f32 0.0, %v561
    %v563 = vpop.f32.mrb[0].mxu0
    %564 = vdwg.mxu0
    %v565 = vadd.f32 %v492, %v562
    %v566 = vxor.u32 %v565, 2147483648
    %v567 = vmul.f32 %v566, 1.442695
    %v568 = vpow.pop %v567
    %v569 = vadd.f32 %v568, 1.0
    %v570 = vrcp.pop %v569
    %v571 = vmul.f32 1.0, %v570
    %v572 = vtanh.pop %v565
    %v573 = vmul.f32 %v571, %v480
    %575 = vrot.lane.b32.xlu0 %v572, 64
    %v576 = vpop.permute.xlu0 %575
    %v578 = vmul.f32 %v571, %v576
    %580 = vrot.lane.b32.xlu0 %v578, 32
    %v581 = vpop.permute.xlu0 %580
    %v583 = vadd.f32 %v573, %v581
    %v584 = vtanh.pop %v583
    %586 = vrot.lane.b32.xlu0 %v584, 64
    %v587 = vpop.permute.xlu0 %586
    %v589 = vmul.f32 %v571, %v587
    %591 = vrot.lane.b32.xlu0 %v589, 32
    %v592 = vpop.permute.xlu0 %591
    %594 = vst.msk [vmem:[#allocation2 + $0x6] sm:$0x3] %vm284, %v592
    %v595 = vld [vmem:[#allocation3 + $0x8] sm:$0x3]
    %v596 = vsel %vm177, %v592, 0
    %598 = vmatprep.subr.mxu0 0.0
    %599 = vmatpush1.msra.mxu0 %v170
    %600 = vmatprep.subr.mxu0 0.0
    %601 = vmatpush1.msra.mxu0 %v171
    %602 = vmatprep.subr.mxu0 0.0
    %603 = vmatpush1.msra.mxu0 %v172
    %604 = vmatprep.subr.mxu0 0.0
    %605 = vmatpush1.msra.mxu0 %v173
    %606 = vmatprep.subr.mxu0 0.0
    %607 = vmatpush1.msra.mxu0 0.0
    %608 = vmatprep.subr.mxu0 0.0
    %609 = vmatpush1.msra.mxu0 0.0
    %610 = vmatprep.subr.mxu0 0.0
    %611 = vmatpush1.msra.mxu0 0.0
    %612 = vmatprep.subr.mxu0 0.0
    %613 = vmatpush1.msra.mxu0 0.0
    %614 = vmatprep.subr.mxu0 0.0
    %615 = vmatpush1.msra.mxu0 0.0
    %616 = vmatprep.subr.mxu0 0.0
    %617 = vmatpush1.msra.mxu0 0.0
    %618 = vmatprep.subr.mxu0 0.0
    %619 = vmatpush1.msra.mxu0 0.0
    %620 = vmatprep.subr.mxu0 0.0
    %621 = vmatpush1.msra.mxu0 0.0
    %622 = vmatprep.subr.mxu0 0.0
    %623 = vmatpush1.msra.mxu0 0.0
    %624 = vmatprep.subr.mxu0 0.0
    %625 = vmatpush1.msra.mxu0 0.0
    %626 = vmatprep.subr.mxu0 0.0
    %627 = vmatpush1.msra.mxu0 0.0
    %628 = vmatprep.subr.mxu0 0.0
    %629 = vmatpush1.msra.mxu0 0.0
    %630 = vmatprep.subr.mxu0 0.0
    %631 = vmatpush1.msra.mxu0 0.0
    %632 = vmatprep.subr.mxu0 0.0
    %633 = vmatpush1.msra.mxu0 0.0
    %634 = vmatprep.subr.mxu0 0.0
    %635 = vmatpush1.msra.mxu0 0.0
    %636 = vmatprep.subr.mxu0 0.0
    %637 = vmatpush1.msra.mxu0 0.0
    %638 = vmatprep.subr.mxu0 0.0
    %639 = vmatpush1.msra.mxu0 0.0
    %640 = vmatprep.subr.mxu0 0.0
    %641 = vmatpush1.msra.mxu0 0.0
    %642 = vmatprep.subr.mxu0 0.0
    %643 = vmatpush1.msra.mxu0 0.0
    %644 = vmatprep.subr.mxu0 0.0
    %645 = vmatpush1.msra.mxu0 0.0
    %646 = vmatprep.subr.mxu0 0.0
    %647 = vmatpush1.msra.mxu0 0.0
    %648 = vmatprep.subr.mxu0 0.0
    %649 = vmatpush1.msra.mxu0 0.0
    %650 = vmatprep.subr.mxu0 0.0
    %651 = vmatpush1.msra.mxu0 0.0
    %652 = vmatprep.subr.mxu0 0.0
    %653 = vmatpush1.msra.mxu0 0.0
    %654 = vmatprep.subr.mxu0 0.0
    %655 = vmatpush1.msra.mxu0 0.0
    %656 = vmatprep.subr.mxu0 0.0
    %657 = vmatpush1.msra.mxu0 0.0
    %658 = vmatprep.subr.mxu0 0.0
    %659 = vmatpush1.msra.mxu0 0.0
    %660 = vmatprep.subr.mxu0 0.0
    %661 = vmatpush1.msra.mxu0 0.0
    %662 = vmatprep.mubr.f32.mxu0 0.0
    %663 = vmatmul.mubr.f32.gmra.mrb[0].mxu0 %v596
    %v664 = vpop.f32.mrb[0].mxu0
    %v665 = vadd.f32 0.0, %v664
    %v666 = vpop.f32.mrb[0].mxu0
    %667 = vdwg.mxu0
    %v668 = vadd.f32 %v595, %v665
    %v669 = vxor.u32 %v668, 2147483648
    %v670 = vmul.f32 %v669, 1.442695
    %v671 = vpow.pop %v670
    %v672 = vadd.f32 %v671, 1.0
    %v673 = vrcp.pop %v672
    %v674 = vmul.f32 1.0, %v673
    %v675 = vtanh.pop %v668
    %v676 = vmul.f32 %v674, %v583
    %678 = vrot.lane.b32.xlu0 %v675, 64
    %v679 = vpop.permute.xlu0 %678
    %v681 = vmul.f32 %v674, %v679
    %683 = vrot.lane.b32.xlu0 %v681, 32
    %v684 = vpop.permute.xlu0 %683
    %v686 = vadd.f32 %v676, %v684
    %v687 = vtanh.pop %v686
    %689 = vrot.lane.b32.xlu0 %v687, 64
    %v690 = vpop.permute.xlu0 %689
    %v692 = vmul.f32 %v674, %v690
    %694 = vrot.lane.b32.xlu0 %v692, 32
    %v695 = vpop.permute.xlu0 %694
    %697 = vst.msk [vmem:[#allocation2 + $0x8] sm:$0x3] %vm284, %v695
    %v698 = vld [vmem:[#allocation3 + $0xa] sm:$0x3]
    %v699 = vsel %vm177, %v695, 0
    %701 = vmatprep.subr.mxu0 0.0
    %702 = vmatpush1.msra.mxu0 %v170
    %703 = vmatprep.subr.mxu0 0.0
    %704 = vmatpush1.msra.mxu0 %v171
    %705 = vmatprep.subr.mxu0 0.0
    %706 = vmatpush1.msra.mxu0 %v172
    %707 = vmatprep.subr.mxu0 0.0
    %708 = vmatpush1.msra.mxu0 %v173
    %709 = vmatprep.subr.mxu0 0.0
    %710 = vmatpush1.msra.mxu0 0.0
    %711 = vmatprep.subr.mxu0 0.0
    %712 = vmatpush1.msra.mxu0 0.0
    %713 = vmatprep.subr.mxu0 0.0
    %714 = vmatpush1.msra.mxu0 0.0
    %715 = vmatprep.subr.mxu0 0.0
    %716 = vmatpush1.msra.mxu0 0.0
    %717 = vmatprep.subr.mxu0 0.0
    %718 = vmatpush1.msra.mxu0 0.0
    %719 = vmatprep.subr.mxu0 0.0
    %720 = vmatpush1.msra.mxu0 0.0
    %721 = vmatprep.subr.mxu0 0.0
    %722 = vmatpush1.msra.mxu0 0.0
    %723 = vmatprep.subr.mxu0 0.0
    %724 = vmatpush1.msra.mxu0 0.0
    %725 = vmatprep.subr.mxu0 0.0
    %726 = vmatpush1.msra.mxu0 0.0
    %727 = vmatprep.subr.mxu0 0.0
    %728 = vmatpush1.msra.mxu0 0.0
    %729 = vmatprep.subr.mxu0 0.0
    %730 = vmatpush1.msra.mxu0 0.0
    %731 = vmatprep.subr.mxu0 0.0
    %732 = vmatpush1.msra.mxu0 0.0
    %733 = vmatprep.subr.mxu0 0.0
    %734 = vmatpush1.msra.mxu0 0.0
    %735 = vmatprep.subr.mxu0 0.0
    %736 = vmatpush1.msra.mxu0 0.0
    %737 = vmatprep.subr.mxu0 0.0
    %738 = vmatpush1.msra.mxu0 0.0
    %739 = vmatprep.subr.mxu0 0.0
    %740 = vmatpush1.msra.mxu0 0.0
    %741 = vmatprep.subr.mxu0 0.0
    %742 = vmatpush1.msra.mxu0 0.0
    %743 = vmatprep.subr.mxu0 0.0
    %744 = vmatpush1.msra.mxu0 0.0
    %745 = vmatprep.subr.mxu0 0.0
    %746 = vmatpush1.msra.mxu0 0.0
    %747 = vmatprep.subr.mxu0 0.0
    %748 = vmatpush1.msra.mxu0 0.0
    %749 = vmatprep.subr.mxu0 0.0
    %750 = vmatpush1.msra.mxu0 0.0
    %751 = vmatprep.subr.mxu0 0.0
    %752 = vmatpush1.msra.mxu0 0.0
    %753 = vmatprep.subr.mxu0 0.0
    %754 = vmatpush1.msra.mxu0 0.0
    %755 = vmatprep.subr.mxu0 0.0
    %756 = vmatpush1.msra.mxu0 0.0
    %757 = vmatprep.subr.mxu0 0.0
    %758 = vmatpush1.msra.mxu0 0.0
    %759 = vmatprep.subr.mxu0 0.0
    %760 = vmatpush1.msra.mxu0 0.0
    %761 = vmatprep.subr.mxu0 0.0
    %762 = vmatpush1.msra.mxu0 0.0
    %763 = vmatprep.subr.mxu0 0.0
    %764 = vmatpush1.msra.mxu0 0.0
    %765 = vmatprep.mubr.f32.mxu0 0.0
    %766 = vmatmul.mubr.f32.gmra.mrb[0].mxu0 %v699
    %v767 = vpop.f32.mrb[0].mxu0
    %v768 = vadd.f32 0.0, %v767
    %v769 = vpop.f32.mrb[0].mxu0
    %770 = vdwg.mxu0
    %v771 = vadd.f32 %v698, %v768
    %v772 = vxor.u32 %v771, 2147483648
    %v773 = vmul.f32 %v772, 1.442695
    %v774 = vpow.pop %v773
    %v775 = vadd.f32 %v774, 1.0
    %v776 = vrcp.pop %v775
    %v777 = vmul.f32 1.0, %v776
    %v778 = vtanh.pop %v771
    %v779 = vmul.f32 %v777, %v686
    %781 = vrot.lane.b32.xlu0 %v778, 64
    %v782 = vpop.permute.xlu0 %781
    %v784 = vmul.f32 %v777, %v782
    %786 = vrot.lane.b32.xlu0 %v784, 32
    %v787 = vpop.permute.xlu0 %786
    %v789 = vadd.f32 %v779, %v787
    %v790 = vtanh.pop %v789
    %792 = vrot.lane.b32.xlu0 %v790, 64
    %v793 = vpop.permute.xlu0 %792
    %v795 = vmul.f32 %v777, %v793
    %797 = vrot.lane.b32.xlu0 %v795, 32
    %v798 = vpop.permute.xlu0 %797
    %800 = vst.msk [vmem:[#allocation2 + $0xa] sm:$0x3] %vm284, %v798
    %v801 = vld [vmem:[#allocation3 + $0xc] sm:$0x3]
    %v802 = vsel %vm177, %v798, 0
    %804 = vmatprep.subr.mxu0 0.0
    %805 = vmatpush1.msra.mxu0 %v170
    %806 = vmatprep.subr.mxu0 0.0
    %807 = vmatpush1.msra.mxu0 %v171
    %808 = vmatprep.subr.mxu0 0.0
    %809 = vmatpush1.msra.mxu0 %v172
    %810 = vmatprep.subr.mxu0 0.0
    %811 = vmatpush1.msra.mxu0 %v173
    %812 = vmatprep.subr.mxu0 0.0
    %813 = vmatpush1.msra.mxu0 0.0
    %814 = vmatprep.subr.mxu0 0.0
    %815 = vmatpush1.msra.mxu0 0.0
    %816 = vmatprep.subr.mxu0 0.0
    %817 = vmatpush1.msra.mxu0 0.0
    %818 = vmatprep.subr.mxu0 0.0
    %819 = vmatpush1.msra.mxu0 0.0
    %820 = vmatprep.subr.mxu0 0.0
    %821 = vmatpush1.msra.mxu0 0.0
    %822 = vmatprep.subr.mxu0 0.0
    %823 = vmatpush1.msra.mxu0 0.0
    %824 = vmatprep.subr.mxu0 0.0
    %825 = vmatpush1.msra.mxu0 0.0
    %826 = vmatprep.subr.mxu0 0.0
    %827 = vmatpush1.msra.mxu0 0.0
    %828 = vmatprep.subr.mxu0 0.0
    %829 = vmatpush1.msra.mxu0 0.0
    %830 = vmatprep.subr.mxu0 0.0
    %831 = vmatpush1.msra.mxu0 0.0
    %832 = vmatprep.subr.mxu0 0.0
    %833 = vmatpush1.msra.mxu0 0.0
    %834 = vmatprep.subr.mxu0 0.0
    %835 = vmatpush1.msra.mxu0 0.0
    %836 = vmatprep.subr.mxu0 0.0
    %837 = vmatpush1.msra.mxu0 0.0
    %838 = vmatprep.subr.mxu0 0.0
    %839 = vmatpush1.msra.mxu0 0.0
    %840 = vmatprep.subr.mxu0 0.0
    %841 = vmatpush1.msra.mxu0 0.0
    %842 = vmatprep.subr.mxu0 0.0
    %843 = vmatpush1.msra.mxu0 0.0
    %844 = vmatprep.subr.mxu0 0.0
    %845 = vmatpush1.msra.mxu0 0.0
    %846 = vmatprep.subr.mxu0 0.0
    %847 = vmatpush1.msra.mxu0 0.0
    %848 = vmatprep.subr.mxu0 0.0
    %849 = vmatpush1.msra.mxu0 0.0
    %850 = vmatprep.subr.mxu0 0.0
    %851 = vmatpush1.msra.mxu0 0.0
    %852 = vmatprep.subr.mxu0 0.0
    %853 = vmatpush1.msra.mxu0 0.0
    %854 = vmatprep.subr.mxu0 0.0
    %855 = vmatpush1.msra.mxu0 0.0
    %856 = vmatprep.subr.mxu0 0.0
    %857 = vmatpush1.msra.mxu0 0.0
    %858 = vmatprep.subr.mxu0 0.0
    %859 = vmatpush1.msra.mxu0 0.0
    %860 = vmatprep.subr.mxu0 0.0
    %861 = vmatpush1.msra.mxu0 0.0
    %862 = vmatprep.subr.mxu0 0.0
    %863 = vmatpush1.msra.mxu0 0.0
    %864 = vmatprep.subr.mxu0 0.0
    %865 = vmatpush1.msra.mxu0 0.0
    %866 = vmatprep.subr.mxu0 0.0
    %867 = vmatpush1.msra.mxu0 0.0
    %868 = vmatprep.mubr.f32.mxu0 0.0
    %869 = vmatmul.mubr.f32.gmra.mrb[0].mxu0 %v802
    %v870 = vpop.f32.mrb[0].mxu0
    %v871 = vadd.f32 0.0, %v870
    %v872 = vpop.f32.mrb[0].mxu0
    %873 = vdwg.mxu0
    %v874 = vadd.f32 %v801, %v871
    %v875 = vxor.u32 %v874, 2147483648
    %v876 = vmul.f32 %v875, 1.442695
    %v877 = vpow.pop %v876
    %v878 = vadd.f32 %v877, 1.0
    %v879 = vrcp.pop %v878
    %v880 = vmul.f32 1.0, %v879
    %v881 = vtanh.pop %v874
    %v882 = vmul.f32 %v880, %v789
    %884 = vrot.lane.b32.xlu0 %v881, 64
    %v885 = vpop.permute.xlu0 %884
    %v887 = vmul.f32 %v880, %v885
    %889 = vrot.lane.b32.xlu0 %v887, 32
    %v890 = vpop.permute.xlu0 %889
    %v892 = vadd.f32 %v882, %v890
    %v893 = vtanh.pop %v892
    %895 = vrot.lane.b32.xlu0 %v893, 64
    %v896 = vpop.permute.xlu0 %895
    %v898 = vmul.f32 %v880, %v896
    %900 = vrot.lane.b32.xlu0 %v898, 32
    %v901 = vpop.permute.xlu0 %900
    %903 = vst.msk [vmem:[#allocation2 + $0xc] sm:$0x3] %vm284, %v901
    %v904 = vld [vmem:[#allocation3 + $0xe] sm:$0x3]
    %v905 = vsel %vm177, %v901, 0
    %907 = vmatprep.subr.mxu0 0.0
    %908 = vmatpush1.msra.mxu0 %v170
    %909 = vmatprep.subr.mxu0 0.0
    %910 = vmatpush1.msra.mxu0 %v171
    %911 = vmatprep.subr.mxu0 0.0
    %912 = vmatpush1.msra.mxu0 %v172
    %913 = vmatprep.subr.mxu0 0.0
    %914 = vmatpush1.msra.mxu0 %v173
    %915 = vmatprep.subr.mxu0 0.0
    %916 = vmatpush1.msra.mxu0 0.0
    %917 = vmatprep.subr.mxu0 0.0
    %918 = vmatpush1.msra.mxu0 0.0
    %919 = vmatprep.subr.mxu0 0.0
    %920 = vmatpush1.msra.mxu0 0.0
    %921 = vmatprep.subr.mxu0 0.0
    %922 = vmatpush1.msra.mxu0 0.0
    %923 = vmatprep.subr.mxu0 0.0
    %924 = vmatpush1.msra.mxu0 0.0
    %925 = vmatprep.subr.mxu0 0.0
    %926 = vmatpush1.msra.mxu0 0.0
    %927 = vmatprep.subr.mxu0 0.0
    %928 = vmatpush1.msra.mxu0 0.0
    %929 = vmatprep.subr.mxu0 0.0
    %930 = vmatpush1.msra.mxu0 0.0
    %931 = vmatprep.subr.mxu0 0.0
    %932 = vmatpush1.msra.mxu0 0.0
    %933 = vmatprep.subr.mxu0 0.0
    %934 = vmatpush1.msra.mxu0 0.0
    %935 = vmatprep.subr.mxu0 0.0
    %936 = vmatpush1.msra.mxu0 0.0
    %937 = vmatprep.subr.mxu0 0.0
    %938 = vmatpush1.msra.mxu0 0.0
    %939 = vmatprep.subr.mxu0 0.0
    %940 = vmatpush1.msra.mxu0 0.0
    %941 = vmatprep.subr.mxu0 0.0
    %942 = vmatpush1.msra.mxu0 0.0
    %943 = vmatprep.subr.mxu0 0.0
    %944 = vmatpush1.msra.mxu0 0.0
    %945 = vmatprep.subr.mxu0 0.0
    %946 = vmatpush1.msra.mxu0 0.0
    %947 = vmatprep.subr.mxu0 0.0
    %948 = vmatpush1.msra.mxu0 0.0
    %949 = vmatprep.subr.mxu0 0.0
    %950 = vmatpush1.msra.mxu0 0.0
    %951 = vmatprep.subr.mxu0 0.0
    %952 = vmatpush1.msra.mxu0 0.0
    %953 = vmatprep.subr.mxu0 0.0
    %954 = vmatpush1.msra.mxu0 0.0
    %955 = vmatprep.subr.mxu0 0.0
    %956 = vmatpush1.msra.mxu0 0.0
    %957 = vmatprep.subr.mxu0 0.0
    %958 = vmatpush1.msra.mxu0 0.0
    %959 = vmatprep.subr.mxu0 0.0
    %960 = vmatpush1.msra.mxu0 0.0
    %961 = vmatprep.subr.mxu0 0.0
    %962 = vmatpush1.msra.mxu0 0.0
    %963 = vmatprep.subr.mxu0 0.0
    %964 = vmatpush1.msra.mxu0 0.0
    %965 = vmatprep.subr.mxu0 0.0
    %966 = vmatpush1.msra.mxu0 0.0
    %967 = vmatprep.subr.mxu0 0.0
    %968 = vmatpush1.msra.mxu0 0.0
    %969 = vmatprep.subr.mxu0 0.0
    %970 = vmatpush1.msra.mxu0 0.0
    %971 = vmatprep.mubr.f32.mxu0 0.0
    %972 = vmatmul.mubr.f32.gmra.mrb[0].mxu0 %v905
    %v973 = vpop.f32.mrb[0].mxu0
    %v974 = vadd.f32 0.0, %v973
    %v975 = vpop.f32.mrb[0].mxu0
    %976 = vdwg.mxu0
    %v977 = vadd.f32 %v904, %v974
    %v978 = vxor.u32 %v977, 2147483648
    %v979 = vmul.f32 %v978, 1.442695
    %v980 = vpow.pop %v979
    %v981 = vadd.f32 %v980, 1.0
    %v982 = vrcp.pop %v981
    %v983 = vmul.f32 1.0, %v982
    %v984 = vtanh.pop %v977
    %v985 = vmul.f32 %v983, %v892
    %987 = vrot.lane.b32.xlu0 %v984, 64
    %v988 = vpop.permute.xlu0 %987
    %v990 = vmul.f32 %v983, %v988
    %992 = vrot.lane.b32.xlu0 %v990, 32
    %v993 = vpop.permute.xlu0 %992
    %v995 = vadd.f32 %v985, %v993
    %v996 = vtanh.pop %v995
    %998 = vrot.lane.b32.xlu0 %v996, 64
    %v999 = vpop.permute.xlu0 %998
    %v1001 = vmul.f32 %v983, %v999
    %1003 = vrot.lane.b32.xlu0 %v1001, 32
    %v1004 = vpop.permute.xlu0 %1003
    %1006 = vst.msk [vmem:[#allocation2 + $0xe] sm:$0x3] %vm284, %v1004
    %1007 = vst.msk [vmem:[#allocation10] sm:$0x3] %vm284, %v1004
    %1009 = vrot.lane.b32.xlu0 %v995, 96
    %v1010 = vpop.permute.xlu0 %1009
    %1012 = vst.msk [vmem:[#allocation12] sm:$0x3] %vm284, %v1010
    %v1013 = vld [vmem:[#allocation2] sm:$0xff]
    %v1014 = vld [vmem:[#allocation2 + $0x8] sm:$0xff]
    %v1015 = vld [vmem:[%s6] sm:$0xff]
    %v1016 = vld [vmem:[%s6 + $0x8] sm:$0xff]
    %v1017 = vld [vmem:[%s6 + $0x10] sm:$0xff]
    %v1018 = vld [vmem:[%s6 + $0x18] sm:$0xff]
    %v1019 = vld [vmem:[%s7] sm:$0x1]
    %v1021 = vlaneseq
    %v1022 = vshrl.u32 %v1021, 7
    %v1023 = vsub.s32 0, %v1022
    %v1024 = vrot.slane %v1019, %v1023
    %v1027 = vsel %vm177, %v1013, 0
    %v1030 = vsel %vm177, %v1014, 0
    %1032 = vmatprep.subr.mxu0 0.0
    %1033 = vmatpush1.msra.mxu0 %v1015
    %1034 = vmatprep.subr.mxu0 0.0
    %1035 = vmatpush1.msra.mxu0 %v1016
    %1036 = vmatprep.subr.mxu0 0.0
    %1037 = vmatpush1.msra.mxu0 %v1017
    %1038 = vmatprep.subr.mxu0 0.0
    %1039 = vmatpush1.msra.mxu0 %v1018
    %1040 = vmatprep.subr.mxu0 0.0
    %1041 = vmatpush1.msra.mxu0 0.0
    %1042 = vmatprep.subr.mxu0 0.0
    %1043 = vmatpush1.msra.mxu0 0.0
    %1044 = vmatprep.subr.mxu0 0.0
    %1045 = vmatpush1.msra.mxu0 0.0
    %1046 = vmatprep.subr.mxu0 0.0
    %1047 = vmatpush1.msra.mxu0 0.0
    %1048 = vmatprep.subr.mxu0 0.0
    %1049 = vmatpush1.msra.mxu0 0.0
    %1050 = vmatprep.subr.mxu0 0.0
    %1051 = vmatpush1.msra.mxu0 0.0
    %1052 = vmatprep.subr.mxu0 0.0
    %1053 = vmatpush1.msra.mxu0 0.0
    %1054 = vmatprep.subr.mxu0 0.0
    %1055 = vmatpush1.msra.mxu0 0.0
    %1056 = vmatprep.subr.mxu0 0.0
    %1057 = vmatpush1.msra.mxu0 0.0
    %1058 = vmatprep.subr.mxu0 0.0
    %1059 = vmatpush1.msra.mxu0 0.0
    %1060 = vmatprep.subr.mxu0 0.0
    %1061 = vmatpush1.msra.mxu0 0.0
    %1062 = vmatprep.subr.mxu0 0.0
    %1063 = vmatpush1.msra.mxu0 0.0
    %1064 = vmatprep.subr.mxu0 0.0
    %1065 = vmatpush1.msra.mxu0 0.0
    %1066 = vmatprep.subr.mxu0 0.0
    %1067 = vmatpush1.msra.mxu0 0.0
    %1068 = vmatprep.subr.mxu0 0.0
    %1069 = vmatpush1.msra.mxu0 0.0
    %1070 = vmatprep.subr.mxu0 0.0
    %1071 = vmatpush1.msra.mxu0 0.0
    %1072 = vmatprep.subr.mxu0 0.0
    %1073 = vmatpush1.msra.mxu0 0.0
    %1074 = vmatprep.subr.mxu0 0.0
    %1075 = vmatpush1.msra.mxu0 0.0
    %1076 = vmatprep.subr.mxu0 0.0
    %1077 = vmatpush1.msra.mxu0 0.0
    %1078 = vmatprep.subr.mxu0 0.0
    %1079 = vmatpush1.msra.mxu0 0.0
    %1080 = vmatprep.subr.mxu0 0.0
    %1081 = vmatpush1.msra.mxu0 0.0
    %1082 = vmatprep.subr.mxu0 0.0
    %1083 = vmatpush1.msra.mxu0 0.0
    %1084 = vmatprep.subr.mxu0 0.0
    %1085 = vmatpush1.msra.mxu0 0.0
    %1086 = vmatprep.subr.mxu0 0.0
    %1087 = vmatpush1.msra.mxu0 0.0
    %1088 = vmatprep.subr.mxu0 0.0
    %1089 = vmatpush1.msra.mxu0 0.0
    %1090 = vmatprep.subr.mxu0 0.0
    %1091 = vmatpush1.msra.mxu0 0.0
    %1092 = vmatprep.subr.mxu0 0.0
    %1093 = vmatpush1.msra.mxu0 0.0
    %1094 = vmatprep.subr.mxu0 0.0
    %1095 = vmatpush1.msra.mxu0 0.0
    %1096 = vmatprep.mubr.f32.mxu0 0.0
    %1097 = vmatmul.mubr.f32.gmra.mrb[0].mxu0 %v1027
    %v1098 = vpop.f32.mrb[0].mxu0
    %v1099 = vadd.f32 %v1024, %v1098
    %v1100 = vpop.f32.mrb[0].mxu0
    %1101 = vmatprep.mubr.f32.mxu0 0.0
    %1102 = vmatmul.mubr.f32.gmra.mrb[0].mxu0 %v1030
    %v1103 = vpop.f32.mrb[0].mxu0
    %v1104 = vadd.f32 %v1024, %v1103
    %v1105 = vpop.f32.mrb[0].mxu0
    %1106 = vdwg.mxu0
    %1107 = vst [vmem:[#allocation3] sm:$0xff] %v1099
    %1108 = vst [vmem:[#allocation3 + $0x8] sm:$0xff] %v1104
    %s1109 = scalar_lea.vmem %s5, 32
    %v1110 = vld [vmem:[%s1109] sm:$0xff]
    %v1111 = vld [vmem:[%s1109 + $0x8] sm:$0xff]
    %v1112 = vld [vmem:[%s1109 + $0x10] sm:$0xff]
    %v1113 = vld [vmem:[%s1109 + $0x18] sm:$0xff]
    %s1114 = scalar_lea.vmem %s1, 2
    %v1115 = vld [vmem:[%s1114] sm:$0x3]
    %s1116 = scalar_lea.vmem %s2, 2
    %v1117 = vld [vmem:[%s1116] sm:$0x3]
    %v1118 = vld [vmem:[#allocation3] sm:$0x3]
    %v1120 = vsel %vm177, %v1115, 0
    %1122 = vmatprep.subr.mxu0 0.0
    %1123 = vmatpush1.msra.mxu0 %v1110
    %1124 = vmatprep.subr.mxu0 0.0
    %1125 = vmatpush1.msra.mxu0 %v1111
    %1126 = vmatprep.subr.mxu0 0.0
    %1127 = vmatpush1.msra.mxu0 %v1112
    %1128 = vmatprep.subr.mxu0 0.0
    %1129 = vmatpush1.msra.mxu0 %v1113
    %1130 = vmatprep.subr.mxu0 0.0
    %1131 = vmatpush1.msra.mxu0 0.0
    %1132 = vmatprep.subr.mxu0 0.0
    %1133 = vmatpush1.msra.mxu0 0.0
    %1134 = vmatprep.subr.mxu0 0.0
    %1135 = vmatpush1.msra.mxu0 0.0
    %1136 = vmatprep.subr.mxu0 0.0
    %1137 = vmatpush1.msra.mxu0 0.0
    %1138 = vmatprep.subr.mxu0 0.0
    %1139 = vmatpush1.msra.mxu0 0.0
    %1140 = vmatprep.subr.mxu0 0.0
    %1141 = vmatpush1.msra.mxu0 0.0
    %1142 = vmatprep.subr.mxu0 0.0
    %1143 = vmatpush1.msra.mxu0 0.0
    %1144 = vmatprep.subr.mxu0 0.0
    %1145 = vmatpush1.msra.mxu0 0.0
    %1146 = vmatprep.subr.mxu0 0.0
    %1147 = vmatpush1.msra.mxu0 0.0
    %1148 = vmatprep.subr.mxu0 0.0
    %1149 = vmatpush1.msra.mxu0 0.0
    %1150 = vmatprep.subr.mxu0 0.0
    %1151 = vmatpush1.msra.mxu0 0.0
    %1152 = vmatprep.subr.mxu0 0.0
    %1153 = vmatpush1.msra.mxu0 0.0
    %1154 = vmatprep.subr.mxu0 0.0
    %1155 = vmatpush1.msra.mxu0 0.0
    %1156 = vmatprep.subr.mxu0 0.0
    %1157 = vmatpush1.msra.mxu0 0.0
    %1158 = vmatprep.subr.mxu0 0.0
    %1159 = vmatpush1.msra.mxu0 0.0
    %1160 = vmatprep.subr.mxu0 0.0
    %1161 = vmatpush1.msra.mxu0 0.0
    %1162 = vmatprep.subr.mxu0 0.0
    %1163 = vmatpush1.msra.mxu0 0.0
    %1164 = vmatprep.subr.mxu0 0.0
    %1165 = vmatpush1.msra.mxu0 0.0
    %1166 = vmatprep.subr.mxu0 0.0
    %1167 = vmatpush1.msra.mxu0 0.0
    %1168 = vmatprep.subr.mxu0 0.0
    %1169 = vmatpush1.msra.mxu0 0.0
    %1170 = vmatprep.subr.mxu0 0.0
    %1171 = vmatpush1.msra.mxu0 0.0
    %1172 = vmatprep.subr.mxu0 0.0
    %1173 = vmatpush1.msra.mxu0 0.0
    %1174 = vmatprep.subr.mxu0 0.0
    %1175 = vmatpush1.msra.mxu0 0.0
    %1176 = vmatprep.subr.mxu0 0.0
    %1177 = vmatpush1.msra.mxu0 0.0
    %1178 = vmatprep.subr.mxu0 0.0
    %1179 = vmatpush1.msra.mxu0 0.0
    %1180 = vmatprep.subr.mxu0 0.0
    %1181 = vmatpush1.msra.mxu0 0.0
    %1182 = vmatprep.subr.mxu0 0.0
    %1183 = vmatpush1.msra.mxu0 0.0
    %1184 = vmatprep.subr.mxu0 0.0
    %1185 = vmatpush1.msra.mxu0 0.0
    %1186 = vmatprep.mubr.f32.mxu0 0.0
    %1187 = vmatmul.mubr.f32.gmra.mrb[0].mxu0 %v1120
    %v1188 = vpop.f32.mrb[0].mxu0
    %v1189 = vadd.f32 0.0, %v1188
    %v1190 = vpop.f32.mrb[0].mxu0
    %1191 = vdwg.mxu0
    %v1192 = vadd.f32 %v1118, %v1189
    %v1193 = vxor.u32 %v1192, 2147483648
    %v1194 = vmul.f32 %v1193, 1.442695
    %v1195 = vpow.pop %v1194
    %v1196 = vadd.f32 %v1195, 1.0
    %v1197 = vrcp.pop %v1196
    %v1198 = vmul.f32 1.0, %v1197
    %v1199 = vtanh.pop %v1192
    %1201 = vrot.lane.b32.xlu0 %v1117, 32
    %v1202 = vpop.permute.xlu0 %1201
    %v1204 = vmul.f32 %v1198, %v1202
    %1206 = vrot.lane.b32.xlu0 %v1199, 64
    %v1207 = vpop.permute.xlu0 %1206
    %v1209 = vmul.f32 %v1198, %v1207
    %1211 = vrot.lane.b32.xlu0 %v1209, 32
    %v1212 = vpop.permute.xlu0 %1211
    %v1214 = vadd.f32 %v1204, %v1212
    %v1215 = vtanh.pop %v1214
    %1217 = vrot.lane.b32.xlu0 %v1215, 64
    %v1218 = vpop.permute.xlu0 %1217
    %v1220 = vmul.f32 %v1198, %v1218
    %v1221 = vld [vmem:[#allocation3 + $0x2] sm:$0x3]
    %1223 = vrot.lane.b32.xlu0 %v1220, 32
    %v1224 = vpop.permute.xlu0 %1223
    %v1225 = vsel %vm177, %v1224, 0
    %1227 = vmatprep.subr.mxu0 0.0
    %1228 = vmatpush1.msra.mxu0 %v1110
    %1229 = vmatprep.subr.mxu0 0.0
    %1230 = vmatpush1.msra.mxu0 %v1111
    %1231 = vmatprep.subr.mxu0 0.0
    %1232 = vmatpush1.msra.mxu0 %v1112
    %1233 = vmatprep.subr.mxu0 0.0
    %1234 = vmatpush1.msra.mxu0 %v1113
    %1235 = vmatprep.subr.mxu0 0.0
    %1236 = vmatpush1.msra.mxu0 0.0
    %1237 = vmatprep.subr.mxu0 0.0
    %1238 = vmatpush1.msra.mxu0 0.0
    %1239 = vmatprep.subr.mxu0 0.0
    %1240 = vmatpush1.msra.mxu0 0.0
    %1241 = vmatprep.subr.mxu0 0.0
    %1242 = vmatpush1.msra.mxu0 0.0
    %1243 = vmatprep.subr.mxu0 0.0
    %1244 = vmatpush1.msra.mxu0 0.0
    %1245 = vmatprep.subr.mxu0 0.0
    %1246 = vmatpush1.msra.mxu0 0.0
    %1247 = vmatprep.subr.mxu0 0.0
    %1248 = vmatpush1.msra.mxu0 0.0
    %1249 = vmatprep.subr.mxu0 0.0
    %1250 = vmatpush1.msra.mxu0 0.0
    %1251 = vmatprep.subr.mxu0 0.0
    %1252 = vmatpush1.msra.mxu0 0.0
    %1253 = vmatprep.subr.mxu0 0.0
    %1254 = vmatpush1.msra.mxu0 0.0
    %1255 = vmatprep.subr.mxu0 0.0
    %1256 = vmatpush1.msra.mxu0 0.0
    %1257 = vmatprep.subr.mxu0 0.0
    %1258 = vmatpush1.msra.mxu0 0.0
    %1259 = vmatprep.subr.mxu0 0.0
    %1260 = vmatpush1.msra.mxu0 0.0
    %1261 = vmatprep.subr.mxu0 0.0
    %1262 = vmatpush1.msra.mxu0 0.0
    %1263 = vmatprep.subr.mxu0 0.0
    %1264 = vmatpush1.msra.mxu0 0.0
    %1265 = vmatprep.subr.mxu0 0.0
    %1266 = vmatpush1.msra.mxu0 0.0
    %1267 = vmatprep.subr.mxu0 0.0
    %1268 = vmatpush1.msra.mxu0 0.0
    %1269 = vmatprep.subr.mxu0 0.0
    %1270 = vmatpush1.msra.mxu0 0.0
    %1271 = vmatprep.subr.mxu0 0.0
    %1272 = vmatpush1.msra.mxu0 0.0
    %1273 = vmatprep.subr.mxu0 0.0
    %1274 = vmatpush1.msra.mxu0 0.0
    %1275 = vmatprep.subr.mxu0 0.0
    %1276 = vmatpush1.msra.mxu0 0.0
    %1277 = vmatprep.subr.mxu0 0.0
    %1278 = vmatpush1.msra.mxu0 0.0
    %1279 = vmatprep.subr.mxu0 0.0
    %1280 = vmatpush1.msra.mxu0 0.0
    %1281 = vmatprep.subr.mxu0 0.0
    %1282 = vmatpush1.msra.mxu0 0.0
    %1283 = vmatprep.subr.mxu0 0.0
    %1284 = vmatpush1.msra.mxu0 0.0
    %1285 = vmatprep.subr.mxu0 0.0
    %1286 = vmatpush1.msra.mxu0 0.0
    %1287 = vmatprep.subr.mxu0 0.0
    %1288 = vmatpush1.msra.mxu0 0.0
    %1289 = vmatprep.subr.mxu0 0.0
    %1290 = vmatpush1.msra.mxu0 0.0
    %1291 = vmatprep.mubr.f32.mxu0 0.0
    %1292 = vmatmul.mubr.f32.gmra.mrb[0].mxu0 %v1225
    %v1293 = vpop.f32.mrb[0].mxu0
    %v1294 = vadd.f32 0.0, %v1293
    %v1295 = vpop.f32.mrb[0].mxu0
    %1296 = vdwg.mxu0
    %v1297 = vadd.f32 %v1221, %v1294
    %v1298 = vxor.u32 %v1297, 2147483648
    %v1299 = vmul.f32 %v1298, 1.442695
    %v1300 = vpow.pop %v1299
    %v1301 = vadd.f32 %v1300, 1.0
    %v1302 = vrcp.pop %v1301
    %v1303 = vmul.f32 1.0, %v1302
    %v1304 = vtanh.pop %v1297
    %v1305 = vmul.f32 %v1303, %v1214
    %1307 = vrot.lane.b32.xlu0 %v1304, 64
    %v1308 = vpop.permute.xlu0 %1307
    %v1310 = vmul.f32 %v1303, %v1308
    %1312 = vrot.lane.b32.xlu0 %v1310, 32
    %v1313 = vpop.permute.xlu0 %1312
    %v1315 = vadd.f32 %v1305, %v1313
    %v1316 = vtanh.pop %v1315
    %1318 = vrot.lane.b32.xlu0 %v1316, 64
    %v1319 = vpop.permute.xlu0 %1318
    %v1321 = vmul.f32 %v1303, %v1319
    %v1322 = vld [vmem:[#allocation3 + $0x4] sm:$0x3]
    %1324 = vrot.lane.b32.xlu0 %v1321, 32
    %v1325 = vpop.permute.xlu0 %1324
    %v1326 = vsel %vm177, %v1325, 0
    %1328 = vmatprep.subr.mxu0 0.0
    %1329 = vmatpush1.msra.mxu0 %v1110
    %1330 = vmatprep.subr.mxu0 0.0
    %1331 = vmatpush1.msra.mxu0 %v1111
    %1332 = vmatprep.subr.mxu0 0.0
    %1333 = vmatpush1.msra.mxu0 %v1112
    %1334 = vmatprep.subr.mxu0 0.0
    %1335 = vmatpush1.msra.mxu0 %v1113
    %1336 = vmatprep.subr.mxu0 0.0
    %1337 = vmatpush1.msra.mxu0 0.0
    %1338 = vmatprep.subr.mxu0 0.0
    %1339 = vmatpush1.msra.mxu0 0.0
    %1340 = vmatprep.subr.mxu0 0.0
    %1341 = vmatpush1.msra.mxu0 0.0
    %1342 = vmatprep.subr.mxu0 0.0
    %1343 = vmatpush1.msra.mxu0 0.0
    %1344 = vmatprep.subr.mxu0 0.0
    %1345 = vmatpush1.msra.mxu0 0.0
    %1346 = vmatprep.subr.mxu0 0.0
    %1347 = vmatpush1.msra.mxu0 0.0
    %1348 = vmatprep.subr.mxu0 0.0
    %1349 = vmatpush1.msra.mxu0 0.0
    %1350 = vmatprep.subr.mxu0 0.0
    %1351 = vmatpush1.msra.mxu0 0.0
    %1352 = vmatprep.subr.mxu0 0.0
    %1353 = vmatpush1.msra.mxu0 0.0
    %1354 = vmatprep.subr.mxu0 0.0
    %1355 = vmatpush1.msra.mxu0 0.0
    %1356 = vmatprep.subr.mxu0 0.0
    %1357 = vmatpush1.msra.mxu0 0.0
    %1358 = vmatprep.subr.mxu0 0.0
    %1359 = vmatpush1.msra.mxu0 0.0
    %1360 = vmatprep.subr.mxu0 0.0
    %1361 = vmatpush1.msra.mxu0 0.0
    %1362 = vmatprep.subr.mxu0 0.0
    %1363 = vmatpush1.msra.mxu0 0.0
    %1364 = vmatprep.subr.mxu0 0.0
    %1365 = vmatpush1.msra.mxu0 0.0
    %1366 = vmatprep.subr.mxu0 0.0
    %1367 = vmatpush1.msra.mxu0 0.0
    %1368 = vmatprep.subr.mxu0 0.0
    %1369 = vmatpush1.msra.mxu0 0.0
    %1370 = vmatprep.subr.mxu0 0.0
    %1371 = vmatpush1.msra.mxu0 0.0
    %1372 = vmatprep.subr.mxu0 0.0
    %1373 = vmatpush1.msra.mxu0 0.0
    %1374 = vmatprep.subr.mxu0 0.0
    %1375 = vmatpush1.msra.mxu0 0.0
    %1376 = vmatprep.subr.mxu0 0.0
    %1377 = vmatpush1.msra.mxu0 0.0
    %1378 = vmatprep.subr.mxu0 0.0
    %1379 = vmatpush1.msra.mxu0 0.0
    %1380 = vmatprep.subr.mxu0 0.0
    %1381 = vmatpush1.msra.mxu0 0.0
    %1382 = vmatprep.subr.mxu0 0.0
    %1383 = vmatpush1.msra.mxu0 0.0
    %1384 = vmatprep.subr.mxu0 0.0
    %1385 = vmatpush1.msra.mxu0 0.0
    %1386 = vmatprep.subr.mxu0 0.0
    %1387 = vmatpush1.msra.mxu0 0.0
    %1388 = vmatprep.subr.mxu0 0.0
    %1389 = vmatpush1.msra.mxu0 0.0
    %1390 = vmatprep.subr.mxu0 0.0
    %1391 = vmatpush1.msra.mxu0 0.0
    %1392 = vmatprep.mubr.f32.mxu0 0.0
    %1393 = vmatmul.mubr.f32.gmra.mrb[0].mxu0 %v1326
    %v1394 = vpop.f32.mrb[0].mxu0
    %v1395 = vadd.f32 0.0, %v1394
    %v1396 = vpop.f32.mrb[0].mxu0
    %1397 = vdwg.mxu0
    %v1398 = vadd.f32 %v1322, %v1395
    %v1399 = vxor.u32 %v1398, 2147483648
    %v1400 = vmul.f32 %v1399, 1.442695
    %v1401 = vpow.pop %v1400
    %v1402 = vadd.f32 %v1401, 1.0
    %v1403 = vrcp.pop %v1402
    %v1404 = vmul.f32 1.0, %v1403
    %v1405 = vtanh.pop %v1398
    %v1406 = vmul.f32 %v1404, %v1315
    %1408 = vrot.lane.b32.xlu0 %v1405, 64
    %v1409 = vpop.permute.xlu0 %1408
    %v1411 = vmul.f32 %v1404, %v1409
    %1413 = vrot.lane.b32.xlu0 %v1411, 32
    %v1414 = vpop.permute.xlu0 %1413
    %v1416 = vadd.f32 %v1406, %v1414
    %v1417 = vtanh.pop %v1416
    %1419 = vrot.lane.b32.xlu0 %v1417, 64
    %v1420 = vpop.permute.xlu0 %1419
    %v1422 = vmul.f32 %v1404, %v1420
    %v1423 = vld [vmem:[#allocation3 + $0x6] sm:$0x3]
    %1425 = vrot.lane.b32.xlu0 %v1422, 32
    %v1426 = vpop.permute.xlu0 %1425
    %v1427 = vsel %vm177, %v1426, 0
    %1429 = vmatprep.subr.mxu0 0.0
    %1430 = vmatpush1.msra.mxu0 %v1110
    %1431 = vmatprep.subr.mxu0 0.0
    %1432 = vmatpush1.msra.mxu0 %v1111
    %1433 = vmatprep.subr.mxu0 0.0
    %1434 = vmatpush1.msra.mxu0 %v1112
    %1435 = vmatprep.subr.mxu0 0.0
    %1436 = vmatpush1.msra.mxu0 %v1113
    %1437 = vmatprep.subr.mxu0 0.0
    %1438 = vmatpush1.msra.mxu0 0.0
    %1439 = vmatprep.subr.mxu0 0.0
    %1440 = vmatpush1.msra.mxu0 0.0
    %1441 = vmatprep.subr.mxu0 0.0
    %1442 = vmatpush1.msra.mxu0 0.0
    %1443 = vmatprep.subr.mxu0 0.0
    %1444 = vmatpush1.msra.mxu0 0.0
    %1445 = vmatprep.subr.mxu0 0.0
    %1446 = vmatpush1.msra.mxu0 0.0
    %1447 = vmatprep.subr.mxu0 0.0
    %1448 = vmatpush1.msra.mxu0 0.0
    %1449 = vmatprep.subr.mxu0 0.0
    %1450 = vmatpush1.msra.mxu0 0.0
    %1451 = vmatprep.subr.mxu0 0.0
    %1452 = vmatpush1.msra.mxu0 0.0
    %1453 = vmatprep.subr.mxu0 0.0
    %1454 = vmatpush1.msra.mxu0 0.0
    %1455 = vmatprep.subr.mxu0 0.0
    %1456 = vmatpush1.msra.mxu0 0.0
    %1457 = vmatprep.subr.mxu0 0.0
    %1458 = vmatpush1.msra.mxu0 0.0
    %1459 = vmatprep.subr.mxu0 0.0
    %1460 = vmatpush1.msra.mxu0 0.0
    %1461 = vmatprep.subr.mxu0 0.0
    %1462 = vmatpush1.msra.mxu0 0.0
    %1463 = vmatprep.subr.mxu0 0.0
    %1464 = vmatpush1.msra.mxu0 0.0
    %1465 = vmatprep.subr.mxu0 0.0
    %1466 = vmatpush1.msra.mxu0 0.0
    %1467 = vmatprep.subr.mxu0 0.0
    %1468 = vmatpush1.msra.mxu0 0.0
    %1469 = vmatprep.subr.mxu0 0.0
    %1470 = vmatpush1.msra.mxu0 0.0
    %1471 = vmatprep.subr.mxu0 0.0
    %1472 = vmatpush1.msra.mxu0 0.0
    %1473 = vmatprep.subr.mxu0 0.0
    %1474 = vmatpush1.msra.mxu0 0.0
    %1475 = vmatprep.subr.mxu0 0.0
    %1476 = vmatpush1.msra.mxu0 0.0
    %1477 = vmatprep.subr.mxu0 0.0
    %1478 = vmatpush1.msra.mxu0 0.0
    %1479 = vmatprep.subr.mxu0 0.0
    %1480 = vmatpush1.msra.mxu0 0.0
    %1481 = vmatprep.subr.mxu0 0.0
    %1482 = vmatpush1.msra.mxu0 0.0
    %1483 = vmatprep.subr.mxu0 0.0
    %1484 = vmatpush1.msra.mxu0 0.0
    %1485 = vmatprep.subr.mxu0 0.0
    %1486 = vmatpush1.msra.mxu0 0.0
    %1487 = vmatprep.subr.mxu0 0.0
    %1488 = vmatpush1.msra.mxu0 0.0
    %1489 = vmatprep.subr.mxu0 0.0
    %1490 = vmatpush1.msra.mxu0 0.0
    %1491 = vmatprep.subr.mxu0 0.0
    %1492 = vmatpush1.msra.mxu0 0.0
    %1493 = vmatprep.mubr.f32.mxu0 0.0
    %1494 = vmatmul.mubr.f32.gmra.mrb[0].mxu0 %v1427
    %v1495 = vpop.f32.mrb[0].mxu0
    %v1496 = vadd.f32 0.0, %v1495
    %v1497 = vpop.f32.mrb[0].mxu0
    %1498 = vdwg.mxu0
    %v1499 = vadd.f32 %v1423, %v1496
    %v1500 = vxor.u32 %v1499, 2147483648
    %v1501 = vmul.f32 %v1500, 1.442695
    %v1502 = vpow.pop %v1501
    %v1503 = vadd.f32 %v1502, 1.0
    %v1504 = vrcp.pop %v1503
    %v1505 = vmul.f32 1.0, %v1504
    %v1506 = vtanh.pop %v1499
    %v1507 = vmul.f32 %v1505, %v1416
    %1509 = vrot.lane.b32.xlu0 %v1506, 64
    %v1510 = vpop.permute.xlu0 %1509
    %v1512 = vmul.f32 %v1505, %v1510
    %1514 = vrot.lane.b32.xlu0 %v1512, 32
    %v1515 = vpop.permute.xlu0 %1514
    %v1517 = vadd.f32 %v1507, %v1515
    %v1518 = vtanh.pop %v1517
    %1520 = vrot.lane.b32.xlu0 %v1518, 64
    %v1521 = vpop.permute.xlu0 %1520
    %v1523 = vmul.f32 %v1505, %v1521
    %v1524 = vld [vmem:[#allocation3 + $0x8] sm:$0x3]
    %1526 = vrot.lane.b32.xlu0 %v1523, 32
    %v1527 = vpop.permute.xlu0 %1526
    %v1528 = vsel %vm177, %v1527, 0
    %1530 = vmatprep.subr.mxu0 0.0
    %1531 = vmatpush1.msra.mxu0 %v1110
    %1532 = vmatprep.subr.mxu0 0.0
    %1533 = vmatpush1.msra.mxu0 %v1111
    %1534 = vmatprep.subr.mxu0 0.0
    %1535 = vmatpush1.msra.mxu0 %v1112
    %1536 = vmatprep.subr.mxu0 0.0
    %1537 = vmatpush1.msra.mxu0 %v1113
    %1538 = vmatprep.subr.mxu0 0.0
    %1539 = vmatpush1.msra.mxu0 0.0
    %1540 = vmatprep.subr.mxu0 0.0
    %1541 = vmatpush1.msra.mxu0 0.0
    %1542 = vmatprep.subr.mxu0 0.0
    %1543 = vmatpush1.msra.mxu0 0.0
    %1544 = vmatprep.subr.mxu0 0.0
    %1545 = vmatpush1.msra.mxu0 0.0
    %1546 = vmatprep.subr.mxu0 0.0
    %1547 = vmatpush1.msra.mxu0 0.0
    %1548 = vmatprep.subr.mxu0 0.0
    %1549 = vmatpush1.msra.mxu0 0.0
    %1550 = vmatprep.subr.mxu0 0.0
    %1551 = vmatpush1.msra.mxu0 0.0
    %1552 = vmatprep.subr.mxu0 0.0
    %1553 = vmatpush1.msra.mxu0 0.0
    %1554 = vmatprep.subr.mxu0 0.0
    %1555 = vmatpush1.msra.mxu0 0.0
    %1556 = vmatprep.subr.mxu0 0.0
    %1557 = vmatpush1.msra.mxu0 0.0
    %1558 = vmatprep.subr.mxu0 0.0
    %1559 = vmatpush1.msra.mxu0 0.0
    %1560 = vmatprep.subr.mxu0 0.0
    %1561 = vmatpush1.msra.mxu0 0.0
    %1562 = vmatprep.subr.mxu0 0.0
    %1563 = vmatpush1.msra.mxu0 0.0
    %1564 = vmatprep.subr.mxu0 0.0
    %1565 = vmatpush1.msra.mxu0 0.0
    %1566 = vmatprep.subr.mxu0 0.0
    %1567 = vmatpush1.msra.mxu0 0.0
    %1568 = vmatprep.subr.mxu0 0.0
    %1569 = vmatpush1.msra.mxu0 0.0
    %1570 = vmatprep.subr.mxu0 0.0
    %1571 = vmatpush1.msra.mxu0 0.0
    %1572 = vmatprep.subr.mxu0 0.0
    %1573 = vmatpush1.msra.mxu0 0.0
    %1574 = vmatprep.subr.mxu0 0.0
    %1575 = vmatpush1.msra.mxu0 0.0
    %1576 = vmatprep.subr.mxu0 0.0
    %1577 = vmatpush1.msra.mxu0 0.0
    %1578 = vmatprep.subr.mxu0 0.0
    %1579 = vmatpush1.msra.mxu0 0.0
    %1580 = vmatprep.subr.mxu0 0.0
    %1581 = vmatpush1.msra.mxu0 0.0
    %1582 = vmatprep.subr.mxu0 0.0
    %1583 = vmatpush1.msra.mxu0 0.0
    %1584 = vmatprep.subr.mxu0 0.0
    %1585 = vmatpush1.msra.mxu0 0.0
    %1586 = vmatprep.subr.mxu0 0.0
    %1587 = vmatpush1.msra.mxu0 0.0
    %1588 = vmatprep.subr.mxu0 0.0
    %1589 = vmatpush1.msra.mxu0 0.0
    %1590 = vmatprep.subr.mxu0 0.0
    %1591 = vmatpush1.msra.mxu0 0.0
    %1592 = vmatprep.subr.mxu0 0.0
    %1593 = vmatpush1.msra.mxu0 0.0
    %1594 = vmatprep.mubr.f32.mxu0 0.0
    %1595 = vmatmul.mubr.f32.gmra.mrb[0].mxu0 %v1528
    %v1596 = vpop.f32.mrb[0].mxu0
    %v1597 = vadd.f32 0.0, %v1596
    %v1598 = vpop.f32.mrb[0].mxu0
    %1599 = vdwg.mxu0
    %v1600 = vadd.f32 %v1524, %v1597
    %v1601 = vxor.u32 %v1600, 2147483648
    %v1602 = vmul.f32 %v1601, 1.442695
    %v1603 = vpow.pop %v1602
    %v1604 = vadd.f32 %v1603, 1.0
    %v1605 = vrcp.pop %v1604
    %v1606 = vmul.f32 1.0, %v1605
    %v1607 = vtanh.pop %v1600
    %v1608 = vmul.f32 %v1606, %v1517
    %1610 = vrot.lane.b32.xlu0 %v1607, 64
    %v1611 = vpop.permute.xlu0 %1610
    %v1613 = vmul.f32 %v1606, %v1611
    %1615 = vrot.lane.b32.xlu0 %v1613, 32
    %v1616 = vpop.permute.xlu0 %1615
    %v1618 = vadd.f32 %v1608, %v1616
    %v1619 = vtanh.pop %v1618
    %1621 = vrot.lane.b32.xlu0 %v1619, 64
    %v1622 = vpop.permute.xlu0 %1621
    %v1624 = vmul.f32 %v1606, %v1622
    %v1625 = vld [vmem:[#allocation3 + $0xa] sm:$0x3]
    %1627 = vrot.lane.b32.xlu0 %v1624, 32
    %v1628 = vpop.permute.xlu0 %1627
    %v1629 = vsel %vm177, %v1628, 0
    %1631 = vmatprep.subr.mxu0 0.0
    %1632 = vmatpush1.msra.mxu0 %v1110
    %1633 = vmatprep.subr.mxu0 0.0
    %1634 = vmatpush1.msra.mxu0 %v1111
    %1635 = vmatprep.subr.mxu0 0.0
    %1636 = vmatpush1.msra.mxu0 %v1112
    %1637 = vmatprep.subr.mxu0 0.0
    %1638 = vmatpush1.msra.mxu0 %v1113
    %1639 = vmatprep.subr.mxu0 0.0
    %1640 = vmatpush1.msra.mxu0 0.0
    %1641 = vmatprep.subr.mxu0 0.0
    %1642 = vmatpush1.msra.mxu0 0.0
    %1643 = vmatprep.subr.mxu0 0.0
    %1644 = vmatpush1.msra.mxu0 0.0
    %1645 = vmatprep.subr.mxu0 0.0
    %1646 = vmatpush1.msra.mxu0 0.0
    %1647 = vmatprep.subr.mxu0 0.0
    %1648 = vmatpush1.msra.mxu0 0.0
    %1649 = vmatprep.subr.mxu0 0.0
    %1650 = vmatpush1.msra.mxu0 0.0
    %1651 = vmatprep.subr.mxu0 0.0
    %1652 = vmatpush1.msra.mxu0 0.0
    %1653 = vmatprep.subr.mxu0 0.0
    %1654 = vmatpush1.msra.mxu0 0.0
    %1655 = vmatprep.subr.mxu0 0.0
    %1656 = vmatpush1.msra.mxu0 0.0
    %1657 = vmatprep.subr.mxu0 0.0
    %1658 = vmatpush1.msra.mxu0 0.0
    %1659 = vmatprep.subr.mxu0 0.0
    %1660 = vmatpush1.msra.mxu0 0.0
    %1661 = vmatprep.subr.mxu0 0.0
    %1662 = vmatpush1.msra.mxu0 0.0
    %1663 = vmatprep.subr.mxu0 0.0
    %1664 = vmatpush1.msra.mxu0 0.0
    %1665 = vmatprep.subr.mxu0 0.0
    %1666 = vmatpush1.msra.mxu0 0.0
    %1667 = vmatprep.subr.mxu0 0.0
    %1668 = vmatpush1.msra.mxu0 0.0
    %1669 = vmatprep.subr.mxu0 0.0
    %1670 = vmatpush1.msra.mxu0 0.0
    %1671 = vmatprep.subr.mxu0 0.0
    %1672 = vmatpush1.msra.mxu0 0.0
    %1673 = vmatprep.subr.mxu0 0.0
    %1674 = vmatpush1.msra.mxu0 0.0
    %1675 = vmatprep.subr.mxu0 0.0
    %1676 = vmatpush1.msra.mxu0 0.0
    %1677 = vmatprep.subr.mxu0 0.0
    %1678 = vmatpush1.msra.mxu0 0.0
    %1679 = vmatprep.subr.mxu0 0.0
    %1680 = vmatpush1.msra.mxu0 0.0
    %1681 = vmatprep.subr.mxu0 0.0
    %1682 = vmatpush1.msra.mxu0 0.0
    %1683 = vmatprep.subr.mxu0 0.0
    %1684 = vmatpush1.msra.mxu0 0.0
    %1685 = vmatprep.subr.mxu0 0.0
    %1686 = vmatpush1.msra.mxu0 0.0
    %1687 = vmatprep.subr.mxu0 0.0
    %1688 = vmatpush1.msra.mxu0 0.0
    %1689 = vmatprep.subr.mxu0 0.0
    %1690 = vmatpush1.msra.mxu0 0.0
    %1691 = vmatprep.subr.mxu0 0.0
    %1692 = vmatpush1.msra.mxu0 0.0
    %1693 = vmatprep.subr.mxu0 0.0
    %1694 = vmatpush1.msra.mxu0 0.0
    %1695 = vmatprep.mubr.f32.mxu0 0.0
    %1696 = vmatmul.mubr.f32.gmra.mrb[0].mxu0 %v1629
    %v1697 = vpop.f32.mrb[0].mxu0
    %v1698 = vadd.f32 0.0, %v1697
    %v1699 = vpop.f32.mrb[0].mxu0
    %1700 = vdwg.mxu0
    %v1701 = vadd.f32 %v1625, %v1698
    %v1702 = vxor.u32 %v1701, 2147483648
    %v1703 = vmul.f32 %v1702, 1.442695
    %v1704 = vpow.pop %v1703
    %v1705 = vadd.f32 %v1704, 1.0
    %v1706 = vrcp.pop %v1705
    %v1707 = vmul.f32 1.0, %v1706
    %v1708 = vtanh.pop %v1701
    %v1709 = vmul.f32 %v1707, %v1618
    %1711 = vrot.lane.b32.xlu0 %v1708, 64
    %v1712 = vpop.permute.xlu0 %1711
    %v1714 = vmul.f32 %v1707, %v1712
    %1716 = vrot.lane.b32.xlu0 %v1714, 32
    %v1717 = vpop.permute.xlu0 %1716
    %v1719 = vadd.f32 %v1709, %v1717
    %v1720 = vtanh.pop %v1719
    %1722 = vrot.lane.b32.xlu0 %v1720, 64
    %v1723 = vpop.permute.xlu0 %1722
    %v1725 = vmul.f32 %v1707, %v1723
    %v1726 = vld [vmem:[#allocation3 + $0xc] sm:$0x3]
    %1728 = vrot.lane.b32.xlu0 %v1725, 32
    %v1729 = vpop.permute.xlu0 %1728
    %v1730 = vsel %vm177, %v1729, 0
    %1732 = vmatprep.subr.mxu0 0.0
    %1733 = vmatpush1.msra.mxu0 %v1110
    %1734 = vmatprep.subr.mxu0 0.0
    %1735 = vmatpush1.msra.mxu0 %v1111
    %1736 = vmatprep.subr.mxu0 0.0
    %1737 = vmatpush1.msra.mxu0 %v1112
    %1738 = vmatprep.subr.mxu0 0.0
    %1739 = vmatpush1.msra.mxu0 %v1113
    %1740 = vmatprep.subr.mxu0 0.0
    %1741 = vmatpush1.msra.mxu0 0.0
    %1742 = vmatprep.subr.mxu0 0.0
    %1743 = vmatpush1.msra.mxu0 0.0
    %1744 = vmatprep.subr.mxu0 0.0
    %1745 = vmatpush1.msra.mxu0 0.0
    %1746 = vmatprep.subr.mxu0 0.0
    %1747 = vmatpush1.msra.mxu0 0.0
    %1748 = vmatprep.subr.mxu0 0.0
    %1749 = vmatpush1.msra.mxu0 0.0
    %1750 = vmatprep.subr.mxu0 0.0
    %1751 = vmatpush1.msra.mxu0 0.0
    %1752 = vmatprep.subr.mxu0 0.0
    %1753 = vmatpush1.msra.mxu0 0.0
    %1754 = vmatprep.subr.mxu0 0.0
    %1755 = vmatpush1.msra.mxu0 0.0
    %1756 = vmatprep.subr.mxu0 0.0
    %1757 = vmatpush1.msra.mxu0 0.0
    %1758 = vmatprep.subr.mxu0 0.0
    %1759 = vmatpush1.msra.mxu0 0.0
    %1760 = vmatprep.subr.mxu0 0.0
    %1761 = vmatpush1.msra.mxu0 0.0
    %1762 = vmatprep.subr.mxu0 0.0
    %1763 = vmatpush1.msra.mxu0 0.0
    %1764 = vmatprep.subr.mxu0 0.0
    %1765 = vmatpush1.msra.mxu0 0.0
    %1766 = vmatprep.subr.mxu0 0.0
    %1767 = vmatpush1.msra.mxu0 0.0
    %1768 = vmatprep.subr.mxu0 0.0
    %1769 = vmatpush1.msra.mxu0 0.0
    %1770 = vmatprep.subr.mxu0 0.0
    %1771 = vmatpush1.msra.mxu0 0.0
    %1772 = vmatprep.subr.mxu0 0.0
    %1773 = vmatpush1.msra.mxu0 0.0
    %1774 = vmatprep.subr.mxu0 0.0
    %1775 = vmatpush1.msra.mxu0 0.0
    %1776 = vmatprep.subr.mxu0 0.0
    %1777 = vmatpush1.msra.mxu0 0.0
    %1778 = vmatprep.subr.mxu0 0.0
    %1779 = vmatpush1.msra.mxu0 0.0
    %1780 = vmatprep.subr.mxu0 0.0
    %1781 = vmatpush1.msra.mxu0 0.0
    %1782 = vmatprep.subr.mxu0 0.0
    %1783 = vmatpush1.msra.mxu0 0.0
    %1784 = vmatprep.subr.mxu0 0.0
    %1785 = vmatpush1.msra.mxu0 0.0
    %1786 = vmatprep.subr.mxu0 0.0
    %1787 = vmatpush1.msra.mxu0 0.0
    %1788 = vmatprep.subr.mxu0 0.0
    %1789 = vmatpush1.msra.mxu0 0.0
    %1790 = vmatprep.subr.mxu0 0.0
    %1791 = vmatpush1.msra.mxu0 0.0
    %1792 = vmatprep.subr.mxu0 0.0
    %1793 = vmatpush1.msra.mxu0 0.0
    %1794 = vmatprep.subr.mxu0 0.0
    %1795 = vmatpush1.msra.mxu0 0.0
    %1796 = vmatprep.mubr.f32.mxu0 0.0
    %1797 = vmatmul.mubr.f32.gmra.mrb[0].mxu0 %v1730
    %v1798 = vpop.f32.mrb[0].mxu0
    %v1799 = vadd.f32 0.0, %v1798
    %v1800 = vpop.f32.mrb[0].mxu0
    %1801 = vdwg.mxu0
    %v1802 = vadd.f32 %v1726, %v1799
    %v1803 = vxor.u32 %v1802, 2147483648
    %v1804 = vmul.f32 %v1803, 1.442695
    %v1805 = vpow.pop %v1804
    %v1806 = vadd.f32 %v1805, 1.0
    %v1807 = vrcp.pop %v1806
    %v1808 = vmul.f32 1.0, %v1807
    %v1809 = vtanh.pop %v1802
    %v1810 = vmul.f32 %v1808, %v1719
    %1812 = vrot.lane.b32.xlu0 %v1809, 64
    %v1813 = vpop.permute.xlu0 %1812
    %v1815 = vmul.f32 %v1808, %v1813
    %1817 = vrot.lane.b32.xlu0 %v1815, 32
    %v1818 = vpop.permute.xlu0 %1817
    %v1820 = vadd.f32 %v1810, %v1818
    %v1821 = vtanh.pop %v1820
    %1823 = vrot.lane.b32.xlu0 %v1821, 64
    %v1824 = vpop.permute.xlu0 %1823
    %v1826 = vmul.f32 %v1808, %v1824
    %v1827 = vld [vmem:[#allocation3 + $0xe] sm:$0x3]
    %1829 = vrot.lane.b32.xlu0 %v1826, 32
    %v1830 = vpop.permute.xlu0 %1829
    %v1831 = vsel %vm177, %v1830, 0
    %1833 = vmatprep.subr.mxu0 0.0
    %1834 = vmatpush1.msra.mxu0 %v1110
    %1835 = vmatprep.subr.mxu0 0.0
    %1836 = vmatpush1.msra.mxu0 %v1111
    %1837 = vmatprep.subr.mxu0 0.0
    %1838 = vmatpush1.msra.mxu0 %v1112
    %1839 = vmatprep.subr.mxu0 0.0
    %1840 = vmatpush1.msra.mxu0 %v1113
    %1841 = vmatprep.subr.mxu0 0.0
    %1842 = vmatpush1.msra.mxu0 0.0
    %1843 = vmatprep.subr.mxu0 0.0
    %1844 = vmatpush1.msra.mxu0 0.0
    %1845 = vmatprep.subr.mxu0 0.0
    %1846 = vmatpush1.msra.mxu0 0.0
    %1847 = vmatprep.subr.mxu0 0.0
    %1848 = vmatpush1.msra.mxu0 0.0
    %1849 = vmatprep.subr.mxu0 0.0
    %1850 = vmatpush1.msra.mxu0 0.0
    %1851 = vmatprep.subr.mxu0 0.0
    %1852 = vmatpush1.msra.mxu0 0.0
    %1853 = vmatprep.subr.mxu0 0.0
    %1854 = vmatpush1.msra.mxu0 0.0
    %1855 = vmatprep.subr.mxu0 0.0
    %1856 = vmatpush1.msra.mxu0 0.0
    %1857 = vmatprep.subr.mxu0 0.0
    %1858 = vmatpush1.msra.mxu0 0.0
    %1859 = vmatprep.subr.mxu0 0.0
    %1860 = vmatpush1.msra.mxu0 0.0
    %1861 = vmatprep.subr.mxu0 0.0
    %1862 = vmatpush1.msra.mxu0 0.0
    %1863 = vmatprep.subr.mxu0 0.0
    %1864 = vmatpush1.msra.mxu0 0.0
    %1865 = vmatprep.subr.mxu0 0.0
    %1866 = vmatpush1.msra.mxu0 0.0
    %1867 = vmatprep.subr.mxu0 0.0
    %1868 = vmatpush1.msra.mxu0 0.0
    %1869 = vmatprep.subr.mxu0 0.0
    %1870 = vmatpush1.msra.mxu0 0.0
    %1871 = vmatprep.subr.mxu0 0.0
    %1872 = vmatpush1.msra.mxu0 0.0
    %1873 = vmatprep.subr.mxu0 0.0
    %1874 = vmatpush1.msra.mxu0 0.0
    %1875 = vmatprep.subr.mxu0 0.0
    %1876 = vmatpush1.msra.mxu0 0.0
    %1877 = vmatprep.subr.mxu0 0.0
    %1878 = vmatpush1.msra.mxu0 0.0
    %1879 = vmatprep.subr.mxu0 0.0
    %1880 = vmatpush1.msra.mxu0 0.0
    %1881 = vmatprep.subr.mxu0 0.0
    %1882 = vmatpush1.msra.mxu0 0.0
    %1883 = vmatprep.subr.mxu0 0.0
    %1884 = vmatpush1.msra.mxu0 0.0
    %1885 = vmatprep.subr.mxu0 0.0
    %1886 = vmatpush1.msra.mxu0 0.0
    %1887 = vmatprep.subr.mxu0 0.0
    %1888 = vmatpush1.msra.mxu0 0.0
    %1889 = vmatprep.subr.mxu0 0.0
    %1890 = vmatpush1.msra.mxu0 0.0
    %1891 = vmatprep.subr.mxu0 0.0
    %1892 = vmatpush1.msra.mxu0 0.0
    %1893 = vmatprep.subr.mxu0 0.0
    %1894 = vmatpush1.msra.mxu0 0.0
    %1895 = vmatprep.subr.mxu0 0.0
    %1896 = vmatpush1.msra.mxu0 0.0
    %1897 = vmatprep.mubr.f32.mxu0 0.0
    %1898 = vmatmul.mubr.f32.gmra.mrb[0].mxu0 %v1831
    %v1899 = vpop.f32.mrb[0].mxu0
    %v1900 = vadd.f32 0.0, %v1899
    %v1901 = vpop.f32.mrb[0].mxu0
    %1902 = vdwg.mxu0
    %v1903 = vadd.f32 %v1827, %v1900
    %v1904 = vxor.u32 %v1903, 2147483648
    %v1905 = vmul.f32 %v1904, 1.442695
    %v1906 = vpow.pop %v1905
    %v1907 = vadd.f32 %v1906, 1.0
    %v1908 = vrcp.pop %v1907
    %v1909 = vmul.f32 1.0, %v1908
    %v1910 = vtanh.pop %v1903
    %v1911 = vmul.f32 %v1909, %v1820
    %1913 = vrot.lane.b32.xlu0 %v1910, 64
    %v1914 = vpop.permute.xlu0 %1913
    %v1916 = vmul.f32 %v1909, %v1914
    %1918 = vrot.lane.b32.xlu0 %v1916, 32
    %v1919 = vpop.permute.xlu0 %1918
    %v1921 = vadd.f32 %v1911, %v1919
    %v1922 = vtanh.pop %v1921
    %1924 = vrot.lane.b32.xlu0 %v1922, 64
    %v1925 = vpop.permute.xlu0 %1924
    %v1927 = vmul.f32 %v1909, %v1925
    %1929 = vrot.lane.b32.xlu0 %v1927, 32
    %v1930 = vpop.permute.xlu0 %1929
    %s1932 = scalar_lea.vmem [#allocation10], 2
    %1933 = vst.msk [vmem:[%s1932] sm:$0x3] %vm284, %v1930
    %1935 = vrot.lane.b32.xlu0 %v1921, 96
    %v1936 = vpop.permute.xlu0 %1935
    %s1938 = scalar_lea.vmem [#allocation12], 2
    %1939 = vst.msk [vmem:[%s1938] sm:$0x3] %vm284, %v1936
    %v1940 = vld [vmem:[#allocation7] sm:$0xff]
    %v1941 = vld [vmem:[#allocation7 + $0x8] sm:$0xff]
    %v1942 = vld [vmem:[#allocation7 + $0x10] sm:$0xff]
    %v1943 = vld [vmem:[#allocation7 + $0x18] sm:$0xff]
    %v1944 = vld [vmem:[%s9] sm:$0x1]
    %v1946 = vlaneseq
    %v1947 = vshrl.u32 %v1946, 7
    %v1948 = vsub.s32 0, %v1947
    %v1949 = vrot.slane %v1944, %v1948
    %v1951 = vsel %vm177, %v1930, 0
    %1953 = vmatprep.subr.mxu0 0.0
    %1954 = vmatpush1.msra.mxu0 %v1940
    %1955 = vmatprep.subr.mxu0 0.0
    %1956 = vmatpush1.msra.mxu0 %v1941
    %1957 = vmatprep.subr.mxu0 0.0
    %1958 = vmatpush1.msra.mxu0 %v1942
    %1959 = vmatprep.subr.mxu0 0.0
    %1960 = vmatpush1.msra.mxu0 %v1943
    %1961 = vmatprep.subr.mxu0 0.0
    %1962 = vmatpush1.msra.mxu0 0.0
    %1963 = vmatprep.subr.mxu0 0.0
    %1964 = vmatpush1.msra.mxu0 0.0
    %1965 = vmatprep.subr.mxu0 0.0
    %1966 = vmatpush1.msra.mxu0 0.0
    %1967 = vmatprep.subr.mxu0 0.0
    %1968 = vmatpush1.msra.mxu0 0.0
    %1969 = vmatprep.subr.mxu0 0.0
    %1970 = vmatpush1.msra.mxu0 0.0
    %1971 = vmatprep.subr.mxu0 0.0
    %1972 = vmatpush1.msra.mxu0 0.0
    %1973 = vmatprep.subr.mxu0 0.0
    %1974 = vmatpush1.msra.mxu0 0.0
    %1975 = vmatprep.subr.mxu0 0.0
    %1976 = vmatpush1.msra.mxu0 0.0
    %1977 = vmatprep.subr.mxu0 0.0
    %1978 = vmatpush1.msra.mxu0 0.0
    %1979 = vmatprep.subr.mxu0 0.0
    %1980 = vmatpush1.msra.mxu0 0.0
    %1981 = vmatprep.subr.mxu0 0.0
    %1982 = vmatpush1.msra.mxu0 0.0
    %1983 = vmatprep.subr.mxu0 0.0
    %1984 = vmatpush1.msra.mxu0 0.0
    %1985 = vmatprep.subr.mxu0 0.0
    %1986 = vmatpush1.msra.mxu0 0.0
    %1987 = vmatprep.subr.mxu0 0.0
    %1988 = vmatpush1.msra.mxu0 0.0
    %1989 = vmatprep.subr.mxu0 0.0
    %1990 = vmatpush1.msra.mxu0 0.0
    %1991 = vmatprep.subr.mxu0 0.0
    %1992 = vmatpush1.msra.mxu0 0.0
    %1993 = vmatprep.subr.mxu0 0.0
    %1994 = vmatpush1.msra.mxu0 0.0
    %1995 = vmatprep.subr.mxu0 0.0
    %1996 = vmatpush1.msra.mxu0 0.0
    %1997 = vmatprep.subr.mxu0 0.0
    %1998 = vmatpush1.msra.mxu0 0.0
    %1999 = vmatprep.subr.mxu0 0.0
    %2000 = vmatpush1.msra.mxu0 0.0
    %2001 = vmatprep.subr.mxu0 0.0
    %2002 = vmatpush1.msra.mxu0 0.0
    %2003 = vmatprep.subr.mxu0 0.0
    %2004 = vmatpush1.msra.mxu0 0.0
    %2005 = vmatprep.subr.mxu0 0.0
    %2006 = vmatpush1.msra.mxu0 0.0
    %2007 = vmatprep.subr.mxu0 0.0
    %2008 = vmatpush1.msra.mxu0 0.0
    %2009 = vmatprep.subr.mxu0 0.0
    %2010 = vmatpush1.msra.mxu0 0.0
    %2011 = vmatprep.subr.mxu0 0.0
    %2012 = vmatpush1.msra.mxu0 0.0
    %2013 = vmatprep.subr.mxu0 0.0
    %2014 = vmatpush1.msra.mxu0 0.0
    %2015 = vmatprep.subr.mxu0 0.0
    %2016 = vmatpush1.msra.mxu0 0.0
    %2017 = vmatprep.mubr.f32.mxu0 0.0
    %2018 = vmatmul.mubr.f32.gmra.mrb[0].mxu0 %v1951
    %v2019 = vpop.f32.mrb[0].mxu0
    %v2020 = vadd.f32 %v1949, %v2019
    %v2021 = vpop.f32.mrb[0].mxu0
    %2022 = vdwg.mxu0
    %v2023 = vld [vmem:[%s10] sm:$0xff]
    %v2024 = vld [vmem:[%s10 + $0x8] sm:$0xff]
    %v2025 = vld [vmem:[%s10 + $0x10] sm:$0xff]
    %v2026 = vld [vmem:[%s10 + $0x18] sm:$0xff]
    %v2027 = vld [vmem:[%s10 + $0x20] sm:$0xff]
    %v2028 = vld [vmem:[%s10 + $0x28] sm:$0xff]
    %v2029 = vld [vmem:[%s10 + $0x30] sm:$0xff]
    %v2030 = vld [vmem:[%s10 + $0x38] sm:$0xff]
    %v2031 = vld [vmem:[%s11] sm:$0x1]
    %v2033 = vlaneseq
    %v2034 = vshrl.u32 %v2033, 7
    %v2035 = vsub.s32 0, %v2034
    %v2036 = vrot.slane %v2031, %v2035
    %vm2038 = vcmask 523264
    %v2040 = vsel %vm2038, %v2020, 0
    %2042 = vmatprep.subr.mxu0 0.0
    %2043 = vmatpush1.msra.mxu0 %v2023
    %2044 = vmatprep.subr.mxu0 0.0
    %2045 = vmatpush1.msra.mxu0 %v2024
    %2046 = vmatprep.subr.mxu0 0.0
    %2047 = vmatpush1.msra.mxu0 %v2025
    %2048 = vmatprep.subr.mxu0 0.0
    %2049 = vmatpush1.msra.mxu0 %v2026
    %2050 = vmatprep.subr.mxu0 0.0
    %2051 = vmatpush1.msra.mxu0 %v2027
    %2052 = vmatprep.subr.mxu0 0.0
    %2053 = vmatpush1.msra.mxu0 %v2028
    %2054 = vmatprep.subr.mxu0 0.0
    %2055 = vmatpush1.msra.mxu0 %v2029
    %2056 = vmatprep.subr.mxu0 0.0
    %2057 = vmatpush1.msra.mxu0 %v2030
    %2058 = vmatprep.subr.mxu0 0.0
    %2059 = vmatpush1.msra.mxu0 0.0
    %2060 = vmatprep.subr.mxu0 0.0
    %2061 = vmatpush1.msra.mxu0 0.0
    %2062 = vmatprep.subr.mxu0 0.0
    %2063 = vmatpush1.msra.mxu0 0.0
    %2064 = vmatprep.subr.mxu0 0.0
    %2065 = vmatpush1.msra.mxu0 0.0
    %2066 = vmatprep.subr.mxu0 0.0
    %2067 = vmatpush1.msra.mxu0 0.0
    %2068 = vmatprep.subr.mxu0 0.0
    %2069 = vmatpush1.msra.mxu0 0.0
    %2070 = vmatprep.subr.mxu0 0.0
    %2071 = vmatpush1.msra.mxu0 0.0
    %2072 = vmatprep.subr.mxu0 0.0
    %2073 = vmatpush1.msra.mxu0 0.0
    %2074 = vmatprep.subr.mxu0 0.0
    %2075 = vmatpush1.msra.mxu0 0.0
    %2076 = vmatprep.subr.mxu0 0.0
    %2077 = vmatpush1.msra.mxu0 0.0
    %2078 = vmatprep.subr.mxu0 0.0
    %2079 = vmatpush1.msra.mxu0 0.0
    %2080 = vmatprep.subr.mxu0 0.0
    %2081 = vmatpush1.msra.mxu0 0.0
    %2082 = vmatprep.subr.mxu0 0.0
    %2083 = vmatpush1.msra.mxu0 0.0
    %2084 = vmatprep.subr.mxu0 0.0
    %2085 = vmatpush1.msra.mxu0 0.0
    %2086 = vmatprep.subr.mxu0 0.0
    %2087 = vmatpush1.msra.mxu0 0.0
    %2088 = vmatprep.subr.mxu0 0.0
    %2089 = vmatpush1.msra.mxu0 0.0
    %2090 = vmatprep.subr.mxu0 0.0
    %2091 = vmatpush1.msra.mxu0 0.0
    %2092 = vmatprep.subr.mxu0 0.0
    %2093 = vmatpush1.msra.mxu0 0.0
    %2094 = vmatprep.subr.mxu0 0.0
    %2095 = vmatpush1.msra.mxu0 0.0
    %2096 = vmatprep.subr.mxu0 0.0
    %2097 = vmatpush1.msra.mxu0 0.0
    %2098 = vmatprep.subr.mxu0 0.0
    %2099 = vmatpush1.msra.mxu0 0.0
    %2100 = vmatprep.subr.mxu0 0.0
    %2101 = vmatpush1.msra.mxu0 0.0
    %2102 = vmatprep.subr.mxu0 0.0
    %2103 = vmatpush1.msra.mxu0 0.0
    %2104 = vmatprep.subr.mxu0 0.0
    %2105 = vmatpush1.msra.mxu0 0.0
    %2106 = vmatprep.mubr.f32.mxu0 0.0
    %2107 = vmatmul.mubr.f32.gmra.mrb[0].mxu0 %v2040
    %v2108 = vpop.f32.mrb[0].mxu0
    %v2109 = vadd.f32 %v2036, %v2108
    %v2110 = vpop.f32.mrb[0].mxu0
    %2111 = vdwg.mxu0
    %vm2112 = vcmask 33792
    %2113 = vst.msk [vmem:[#allocation9] sm:$0x3] %vm2112, %v2109
    // Predicated region
    $region58: #{tpu_custom_call.1} parent=1 // pred_check
      _
    $region59: #{tpu_custom_call.1} parent=1 // pred_check_branch
      %2115 = sbr.rel (0) target = $region61
    $region60: #{tpu_custom_call.1} parent=1 // pred_region
      %s2117 = ssub.s32 32, 32
      %2118 = vsyncadd [#allocation6], %s2117
      %s2120 = sshll.u32 [#allocation9], 4
      %s2121 = int_to_ptr.vmem [resolvable:$true] %s2120
      %2123 = dma.vmem_to_hbm [thread:$0]  %s2121, 32, %s12, [#allocation6]
    $region61: #{tpu_custom_call.1} parent=1 // pred_fallthru
      _
    // Predicated region
    $region62: #{tpu_custom_call.1} parent=1 // pred_check
      _
    $region63: #{tpu_custom_call.1} parent=1 // pred_check_branch
      %2125 = sbr.rel (0) target = $region65
    $region64: #{tpu_custom_call.1} parent=1 // pred_region
      %s2127 = ssub.s32 64, 64
      %2128 = vsyncadd [#allocation11], %s2127
      %s2129 = sshll.u32 [#allocation10], 4
      %s2130 = int_to_ptr.vmem [resolvable:$true] %s2129
      %2135 = dma.vmem_to_hbm [thread:$0]  %s2130, 64, %s13, [#allocation11], 32, 32, 2
    $region65: #{tpu_custom_call.1} parent=1 // pred_fallthru
      _
    // Predicated region
    $region66: #{tpu_custom_call.1} parent=1 // pred_check
      _
    $region67: #{tpu_custom_call.1} parent=1 // pred_check_branch
      %2137 = sbr.rel (0) target = $region69
    $region68: #{tpu_custom_call.1} parent=1 // pred_region
      %s2139 = ssub.s32 64, 64
      %2140 = vsyncadd [#allocation11], %s2139
      %s2141 = sshll.u32 [#allocation12], 4
      %s2142 = int_to_ptr.vmem [resolvable:$true] %s2141
      %2147 = dma.vmem_to_hbm [thread:$0]  %s2142, 64, %s14, [#allocation11], 32, 32, 2
    $region69: #{tpu_custom_call.1} parent=1 // pred_fallthru
      _
    // Predicated region
    $region70: #{tpu_custom_call.1} parent=1 // pred_check
      _
    $region71: #{tpu_custom_call.1} parent=1 // pred_check_branch
      %2149 = sbr.rel (0) target = $region73
    $region72: #{tpu_custom_call.1} parent=1 // pred_region
      %2150 = dma.done [#allocation6], 32
    $region73: #{tpu_custom_call.1} parent=1 // pred_fallthru
      _
    // Predicated region
    $region74: #{tpu_custom_call.1} parent=1 // pred_check
      _
    $region75: #{tpu_custom_call.1} parent=1 // pred_check_branch
      %2152 = sbr.rel (0) target = $region77
    $region76: #{tpu_custom_call.1} parent=1 // pred_region
      %2153 = dma.done [#allocation11], 64
    $region77: #{tpu_custom_call.1} parent=1 // pred_fallthru
      _
    // Predicated region
    $region78: #{tpu_custom_call.1} parent=1 // pred_check
      _
    $region79: #{tpu_custom_call.1} parent=1 // pred_check_branch
      %2155 = sbr.rel (0) target = $region81
    $region80: #{tpu_custom_call.1} parent=1 // pred_region
      %2156 = dma.done [#allocation11], 64
    $region81: #{tpu_custom_call.1} parent=1 // pred_fallthru
      _
    %2157 = vsyncpa [#allocation5], 1
    %2158 = vsyncpa [#allocation8], 1
    %2159 = vsyncpa [#allocation6], 1
    %2160 = vsyncpa [#allocation11], 1

</llo_original>
